<compile_context>
chip_gen: v6e
topology: v6e:2x2x1
jax: 0.10.0
libtpu: 0.0.40
codegen_flags: <defaults>
</compile_context>

<pallas_src>
import functools

import jax
import jax.numpy as jnp
from jax.experimental import pallas as pl
from jax.experimental.pallas import tpu as pltpu


def _round_up(x, m):
    return (x + m - 1) // m * m


def _choose_batch_block(n):
    """Rows per grid step.  Must be a multiple of 8 or equal to N (output block
    sublane rule); larger blocks amortize per-step overhead and keep the fc
    head / output store from being 1-sublane operations."""
    if n <= 8:
        return n
    for nb in (64, 32, 16, 8):
        if n % nb == 0:
            return nb
    return n


def _choose_tile_hw(hw, nb, k_pad, c_pad, vmem_budget=12 * 1024 * 1024):
    """Largest spatial tile that divides HW and fits a conservative VMEM budget.
    Prefers TILE_HW == HW, which removes the reduction axis entirely."""
    def fits(tile):
        patch_bytes = nb * tile * k_pad * 2 * 2   # bf16 patches, double-buffered
        y_bytes = nb * tile * c_pad * 4           # f32 conv activations
        return patch_bytes + y_bytes <= vmem_budget

    if fits(hw):
        return hw
    for cand in (4096, 2048, 1024, 512, 256, 128, 64, 32, 16, 8):
        if hw % cand == 0 and fits(cand):
            return cand
    return hw


# ------------------------------ Pallas kernel --------------------------------

def fused_backbone_head_kernel(p_ref, wc_ref, bc_ref, wfc_ref, bfc_ref,
                               o_ref, acc_ref, *, inv_hw, num_tiles):
    """conv(3x3)-as-GEMM + bias + ReLU + GAP + new fc head for a batch block.

    grid = (N // Nb, num_tiles); axis 0 = batch blocks (parallel),
    axis 1 = spatial tiles (arbitrary reduction; degenerate when num_tiles==1).

    p_ref   : [Nb, TILE_HW, K_pad]  bf16 im2col patches for this (block, tile)
    wc_ref  : [K_pad, C_pad]        bf16 conv weight (im2col layout, zero-padded)
    bc_ref  : [1, C_pad]            f32 conv bias (zero-padded)
    wfc_ref : [C_pad, NC_pad]       f32 replaced fc weight (zero-padded)
    bfc_ref : [1, NC_pad]           f32 replaced fc bias (zero-padded)
    o_ref   : [Nb, NC_pad]          f32 logits for this batch block
    acc_ref : [Nb, C_pad]           f32 running GAP sum (only used if num_tiles>1)
    """
    nb, tile_hw, k = p_ref.shape
    c_pad = wc_ref.shape[1]

    # conv-as-GEMM on the MXU (bf16 operands, f32 accumulation); batch and
    # spatial dims are flattened so the whole block is one dense matmul.
    p = p_ref[...].reshape(nb * tile_hw, k)
    y = jnp.dot(p, wc_ref[...], preferred_element_type=jnp.float32)
    y = jnp.maximum(y + bc_ref[...], 0.0)                 # bias + ReLU in f32

    # Partial global-average-pool sum for this (batch block, spatial tile).
    part = jnp.sum(y.reshape(nb, tile_hw, c_pad), axis=1)  # [Nb, C_pad] f32

    def head(feat_sum):
        feats = feat_sum * inv_hw                           # finish GAP (mean)
        logits = jnp.dot(feats, wfc_ref[...],
                         preferred_element_type=jnp.float32)
        o_ref[...] = (logits + bfc_ref[...]).astype(o_ref.dtype)

    if num_tiles == 1:
        # Whole image in one tile: no reduction axis, no accumulator traffic,
        # no pl.when reset/finalize pair.
        head(part)
    else:
        t = pl.program_id(1)

        @pl.when(t == 0)
        def _():
            acc_ref[...] = jnp.zeros_like(acc_ref)

        acc_ref[...] += part

        @pl.when(t == num_tiles - 1)
        def _():
            head(acc_ref[...])


# ------------------------------- JAX wrappers ---------------------------------

def _im2col_3x3_pad1(x):
    """x: [N, C, H, W] -> patches [N, H*W, C*9]; K ordered (C, ki, kj) to match
    the PyTorch weight reshape Wc.reshape(C_feat, C_in*9)."""
    N, C, H, W = x.shape
    xp = jnp.pad(x, ((0, 0), (0, 0), (1, 1), (1, 1)))
    shifts = []
    for ki in range(3):
        for kj in range(3):
            shifts.append(xp[:, :, ki:ki + H, kj:kj + W])   # [N, C, H, W]
    p = jnp.stack(shifts, axis=2)                            # [N, C, 9, H, W]
    p = p.reshape(N, C * 9, H, W)                            # flat idx ci*9+ki*3+kj
    p = jnp.transpose(p, (0, 2, 3, 1))                       # [N, H, W, C*9]
    return p.reshape(N, H * W, C * 9)


def new_model_forward(x, params, *, compute_dtype=jnp.bfloat16):
    """Forward pass of NewModel: backbone conv+ReLU+GAP -> replaced fc head."""
    N, C_in, H, W = x.shape
    HW = H * W
    wc, bc, wfc, bfc = params["wc"], params["bc"], params["wfc"], params["bfc"]
    C_feat = wc.shape[0]
    num_classes = wfc.shape[0]

    K = C_in * 9
    # Pad K only to the sublane packing quantum of the streaming dtype
    # (16 for bf16, 8 for f32): 36 -> 48 here, NOT 128 (old 3.56x HBM blowup).
    k_quantum = 16 if compute_dtype == jnp.bfloat16 else 8
    K_pad = _round_up(K, k_quantum)
    C_pad = _round_up(C_feat, 128)          # conv out / fc in, lane-dense
    NC_pad = _round_up(num_classes, 128)    # fc output, lane-dense (unmasked vst)

    Nb = _choose_batch_block(N)
    TILE_HW = _choose_tile_hw(HW, Nb, K_pad, C_pad)
    num_tiles = HW // TILE_HW

    # im2col patches, cast to the streaming dtype, tiny K pad only.
    patches = _im2col_3x3_pad1(x).astype(compute_dtype)           # [N, HW, K]
    patches = jnp.pad(patches, ((0, 0), (0, 0), (0, K_pad - K)))  # [N, HW, K_pad]

    # Conv weight in im2col GEMM layout (bf16), zero-padded on both dims.
    wc_t = wc.reshape(C_feat, K).T.astype(compute_dtype)          # [K, C_feat]
    wc_t = jnp.pad(wc_t, ((0, K_pad - K), (0, C_pad - C_feat)))
    bc_p = jnp.pad(bc.reshape(1, -1), ((0, 0), (0, C_pad - C_feat)))

    # Replaced head is tiny: keep it in f32 (no meaningful traffic win from bf16).
    wfc_t = jnp.pad(wfc.T, ((0, C_pad - C_feat), (0, NC_pad - num_classes)))
    bfc_p = jnp.pad(bfc.reshape(1, -1), ((0, 0), (0, NC_pad - num_classes)))

    kernel = functools.partial(fused_backbone_head_kernel,
                               inv_hw=1.0 / float(HW), num_tiles=num_tiles)

    # Honest (un-padded) cost estimate.
    flops = 2 * N * HW * K * C_feat + 2 * N * C_feat * num_classes
    bytes_accessed = (patches.size * patches.dtype.itemsize
                      + wc_t.size * wc_t.dtype.itemsize
                      + bc_p.size * 4 + wfc_t.size * 4 + bfc_p.size * 4
                      + N * NC_pad * 4)

    def build_call(single_buffer_consts):
        const_kw = {}
        if single_buffer_consts:
            # Constant-index operands never change block -> single-buffer them
            # (pure VMEM headroom; matters most on v7x's 64 MiB VMEM).
            const_kw = dict(pipeline_mode=pl.Buffered(1))
        in_specs = [
            pl.BlockSpec((Nb, TILE_HW, K_pad), lambda b, t: (b, t, 0)),
            pl.BlockSpec((K_pad, C_pad), lambda b, t: (0, 0), **const_kw),
            pl.BlockSpec((1, C_pad), lambda b, t: (0, 0), **const_kw),
            pl.BlockSpec((C_pad, NC_pad), lambda b, t: (0, 0), **const_kw),
            pl.BlockSpec((1, NC_pad), lambda b, t: (0, 0), **const_kw),
        ]
        return pl.pallas_call(
            kernel,
            out_shape=jax.ShapeDtypeStruct((N, NC_pad), jnp.float32),
            grid=(N // Nb, num_tiles),
            in_specs=in_specs,
            out_specs=pl.BlockSpec((Nb, NC_pad), lambda b, t: (b, 0)),
            scratch_shapes=[pltpu.VMEM((Nb, C_pad), jnp.float32)],
            compiler_params=pltpu.CompilerParams(
                # On v7x, pltpu.CORE_PARALLEL on the batch-block axis would
                # guarantee sharding across the 2 TensorCores once N//Nb > 1.
                dimension_semantics=("parallel", "arbitrary")),
            cost_estimate=pl.CostEstimate(
                flops=flops, transcendentals=0, bytes_accessed=bytes_accessed),
        )

    args = (patches, wc_t, bc_p, wfc_t, bfc_p)
    try:
        out = build_call(single_buffer_consts=True)(*args)
    except Exception:
        # Fallback for Pallas versions without pipeline_mode=pl.Buffered(1).
        out = build_call(single_buffer_consts=False)(*args)

    return out[:, :num_classes]


def new_model_reference(x, params, compute_dtype=jnp.float32):
    """Pure-JAX reference.  compute_dtype=bfloat16 mirrors the kernel's
    mixed-precision streams (bf16 operands, f32 accumulation)."""
    wc, bc, wfc, bfc = params["wc"], params["bc"], params["wfc"], params["bfc"]
    y = jax.lax.conv_general_dilated(
        x.astype(compute_dtype), wc.astype(compute_dtype),
        window_strides=(1, 1), padding="SAME",
        dimension_numbers=("NCHW", "OIHW", "NCHW"),
        preferred_element_type=jnp.float32)
    y = jnp.maximum(y + bc[None, :, None, None], 0.0)
    feats = jnp.mean(y, axis=(2, 3))                               # [N, C_feat]
    return feats @ wfc.T + bfc


# ----------------------------------- main -------------------------------------

if __name__ == "__main__":
    N, C_in, H, W = 2, 4, 16, 16
    C_feat, num_classes = 32, 10

    key = jax.random.PRNGKey(0)
    k_x, k_wc, k_bc, k_wfc, k_bfc = jax.random.split(key, 5)

    x = jax.random.normal(k_x, (N, C_in, H, W), dtype=jnp.float32)
    params = {
        # "pretrained" backbone conv (frozen / synthetic)
        "wc": jax.random.normal(k_wc, (C_feat, C_in, 3, 3), dtype=jnp.float32) * 0.1,
        "bc": jax.random.normal(k_bc, (C_feat,), dtype=jnp.float32) * 0.1,
        # replaced classification head: nn.Linear(in_features=C_feat, num_classes)
        "wfc": jax.random.normal(k_wfc, (num_classes, C_feat), dtype=jnp.float32) * 0.1,
        "bfc": jax.random.normal(k_bfc, (num_classes,), dtype=jnp.float32) * 0.1,
    }

    out = jax.block_until_ready(new_model_forward(x, params))
    assert out.shape == (N, num_classes)

    # Apples-to-apples check: same bf16-rounded conv operands, f32 accumulation.
    ref_mixed = new_model_reference(x, params, compute_dtype=jnp.bfloat16)
    assert jnp.allclose(out, ref_mixed, atol=2e-3, rtol=2e-3), \
        "mismatch vs mixed-precision JAX reference"

    # Sanity check vs the pure-f32 PyTorch-equivalent forward
    # (difference is only bf16 rounding of the conv operands).
    ref_f32 = new_model_reference(x, params, compute_dtype=jnp.float32)
    assert jnp.allclose(out, ref_f32, atol=5e-2, rtol=5e-2), \
        "mismatch vs f32 JAX reference"

    print("KERNEL_OK")
</pallas_src>

<mosaic_0001>
module attributes {stable_mosaic.version = 11 : i64} {
  func.func @fused_backbone_head_kernel(%arg0: i32, %arg1: i32, %arg2: memref<2x256x48xbf16, #tpu.memory_space<vmem>>, %arg3: memref<48x128xbf16, #tpu.memory_space<vmem>>, %arg4: memref<1x128xf32, #tpu.memory_space<vmem>>, %arg5: memref<128x128xf32, #tpu.memory_space<vmem>>, %arg6: memref<1x128xf32, #tpu.memory_space<vmem>>, %arg7: memref<2x128xf32, #tpu.memory_space<vmem>>, %arg8: memref<2x128xf32, #tpu.memory_space<vmem>>) attributes {dimension_semantics = [#tpu.dimension_semantics<parallel>, #tpu.dimension_semantics<arbitrary>], iteration_bounds = array<i64: 1, 1>, scalar_prefetch = 0 : i64, scratch_operands = 1 : i64, tpu.core_type = #tpu.core_type<tc>, window_params = [{transform_indices = @transform_0, window_bounds = array<i64: 2, 256, 48>}, {pipeline_mode = #tpu.pipeline_mode<synchronous>, transform_indices = @transform_1, window_bounds = array<i64: 48, 128>}, {pipeline_mode = #tpu.pipeline_mode<synchronous>, transform_indices = @transform_2, window_bounds = array<i64: 1, 128>}, {pipeline_mode = #tpu.pipeline_mode<synchronous>, transform_indices = @transform_3, window_bounds = array<i64: 128, 128>}, {pipeline_mode = #tpu.pipeline_mode<synchronous>, transform_indices = @transform_4, window_bounds = array<i64: 1, 128>}, {transform_indices = @transform_5, window_bounds = array<i64: 2, 128>}]} {
    %c0 = arith.constant 0 : index
    %c0_0 = arith.constant 0 : index
    %c0_1 = arith.constant 0 : index
    %0 = vector.load %arg2[%c0, %c0_0, %c0_1] : memref<2x256x48xbf16, #tpu.memory_space<vmem>>, vector<2x256x48xbf16>
    %1 = vector.shape_cast %0 : vector<2x256x48xbf16> to vector<512x48xbf16>
    %c0_2 = arith.constant 0 : index
    %c0_3 = arith.constant 0 : index
    %2 = vector.load %arg3[%c0_2, %c0_3] : memref<48x128xbf16, #tpu.memory_space<vmem>>, vector<48x128xbf16>
    %cst = arith.constant dense<0.000000e+00> : vector<512x128xf32>
    %3 = tpu.matmul %1, %2, %cst {dimension_numbers = #tpu.dot_dimension_numbers<[1], [0], [0], [1], [0, 0, 1, 1], [], []>} : vector<512x48xbf16>, vector<48x128xbf16>, vector<512x128xf32> -> vector<512x128xf32>
    %c0_4 = arith.constant 0 : index
    %c0_5 = arith.constant 0 : index
    %4 = vector.load %arg4[%c0_4, %c0_5] : memref<1x128xf32, #tpu.memory_space<vmem>>, vector<1x128xf32>
    %5 = vector.broadcast %4 : vector<1x128xf32> to vector<512x128xf32>
    %6 = arith.addf %3, %5 : vector<512x128xf32>
    %cst_6 = arith.constant 0.000000e+00 : f32
    %7 = vector.broadcast %cst_6 : f32 to vector<512x128xf32>
    %8 = arith.maximumf %6, %7 : vector<512x128xf32>
    %9 = vector.shape_cast %8 : vector<512x128xf32> to vector<2x256x128xf32>
    %cst_7 = arith.constant dense<0.000000e+00> : vector<2x128xf32>
    %10 = vector.multi_reduction <add>, %9, %cst_7 [1] : vector<2x256x128xf32> to vector<2x128xf32>
    %cst_8 = arith.constant 3.906250e-03 : f32
    %11 = vector.broadcast %cst_8 : f32 to vector<2x128xf32>
    %12 = arith.mulf %10, %11 : vector<2x128xf32>
    %c0_9 = arith.constant 0 : index
    %c0_10 = arith.constant 0 : index
    %13 = vector.load %arg5[%c0_9, %c0_10] : memref<128x128xf32, #tpu.memory_space<vmem>>, vector<128x128xf32>
    %cst_11 = arith.constant dense<0.000000e+00> : vector<2x128xf32>
    %14 = tpu.matmul %12, %13, %cst_11 {dimension_numbers = #tpu.dot_dimension_numbers<[1], [0], [0], [1], [0, 0, 1, 1], [], []>} : vector<2x128xf32>, vector<128x128xf32>, vector<2x128xf32> -> vector<2x128xf32>
    %c0_12 = arith.constant 0 : index
    %c0_13 = arith.constant 0 : index
    %15 = vector.load %arg6[%c0_12, %c0_13] : memref<1x128xf32, #tpu.memory_space<vmem>>, vector<1x128xf32>
    %16 = vector.broadcast %15 : vector<1x128xf32> to vector<2x128xf32>
    %17 = arith.addf %14, %16 : vector<2x128xf32>
    %c0_14 = arith.constant 0 : index
    %c0_15 = arith.constant 0 : index
    %18 = vector.load %arg7[%c0_14, %c0_15] : memref<2x128xf32, #tpu.memory_space<vmem>>, vector<2x128xf32>
    tpu.vector_store %arg7[%c0_14, %c0_15], %17 {strides = array<i32>} : memref<2x128xf32, #tpu.memory_space<vmem>>, vector<2x128xf32>,
    return
  }
  func.func @transform_0(%arg0: i32, %arg1: i32) -> (i32, i32, i32) {
    %c0_i32 = arith.constant 0 : i32
    %c0_i32_0 = arith.constant 0 : i32
    return %arg0, %arg1, %c0_i32 : i32, i32, i32
  }
  func.func @transform_1(%arg0: i32, %arg1: i32) -> (i32, i32) {
    %c0_i32 = arith.constant 0 : i32
    %c0_i32_0 = arith.constant 0 : i32
    %c0_i32_1 = arith.constant 0 : i32
    return %c0_i32, %c0_i32_0 : i32, i32
  }
  func.func @transform_2(%arg0: i32, %arg1: i32) -> (i32, i32) {
    %c0_i32 = arith.constant 0 : i32
    %c0_i32_0 = arith.constant 0 : i32
    %c0_i32_1 = arith.constant 0 : i32
    return %c0_i32, %c0_i32_0 : i32, i32
  }
  func.func @transform_3(%arg0: i32, %arg1: i32) -> (i32, i32) {
    %c0_i32 = arith.constant 0 : i32
    %c0_i32_0 = arith.constant 0 : i32
    %c0_i32_1 = arith.constant 0 : i32
    return %c0_i32, %c0_i32_0 : i32, i32
  }
  func.func @transform_4(%arg0: i32, %arg1: i32) -> (i32, i32) {
    %c0_i32 = arith.constant 0 : i32
    %c0_i32_0 = arith.constant 0 : i32
    %c0_i32_1 = arith.constant 0 : i32
    return %c0_i32, %c0_i32_0 : i32, i32
  }
  func.func @transform_5(%arg0: i32, %arg1: i32) -> (i32, i32) {
    %c0_i32 = arith.constant 0 : i32
    %c0_i32_0 = arith.constant 0 : i32
    return %arg0, %c0_i32 : i32, i32
  }
}

module attributes {stable_mosaic.version = 11 : i64} {
  func.func @fused_backbone_head_kernel(%arg0: i32, %arg1: i32, %arg2: memref<2x256x48xbf16, #tpu.memory_space<vmem>>, %arg3: memref<48x128xbf16, #tpu.memory_space<vmem>>, %arg4: memref<1x128xf32, #tpu.memory_space<vmem>>, %arg5: memref<128x128xf32, #tpu.memory_space<vmem>>, %arg6: memref<1x128xf32, #tpu.memory_space<vmem>>, %arg7: memref<2x128xf32, #tpu.memory_space<vmem>>, %arg8: memref<2x128xf32, #tpu.memory_space<vmem>>) attributes {dimension_semantics = [#tpu.dimension_semantics<parallel>, #tpu.dimension_semantics<arbitrary>], iteration_bounds = array<i64: 1, 1>, scalar_prefetch = 0 : i64, scratch_operands = 1 : i64, tpu.core_type = #tpu.core_type<tc>, window_params = [{transform_indices = @transform_0, window_bounds = array<i64: 2, 256, 48>}, {pipeline_mode = #tpu.pipeline_mode<synchronous>, transform_indices = @transform_1, window_bounds = array<i64: 48, 128>}, {pipeline_mode = #tpu.pipeline_mode<synchronous>, transform_indices = @transform_2, window_bounds = array<i64: 1, 128>}, {pipeline_mode = #tpu.pipeline_mode<synchronous>, transform_indices = @transform_3, window_bounds = array<i64: 128, 128>}, {pipeline_mode = #tpu.pipeline_mode<synchronous>, transform_indices = @transform_4, window_bounds = array<i64: 1, 128>}, {transform_indices = @transform_5, window_bounds = array<i64: 2, 128>}]} {
    %c0 = arith.constant 0 : index
    %c0_0 = arith.constant 0 : index
    %c0_1 = arith.constant 0 : index
    %0 = vector.load %arg2[%c0, %c0_0, %c0_1] : memref<2x256x48xbf16, #tpu.memory_space<vmem>>, vector<2x256x48xbf16>
    %1 = vector.shape_cast %0 : vector<2x256x48xbf16> to vector<512x48xbf16>
    %c0_2 = arith.constant 0 : index
    %c0_3 = arith.constant 0 : index
    %2 = vector.load %arg3[%c0_2, %c0_3] : memref<48x128xbf16, #tpu.memory_space<vmem>>, vector<48x128xbf16>
    %cst = arith.constant dense<0.000000e+00> : vector<512x128xf32>
    %3 = tpu.matmul %1, %2, %cst {dimension_numbers = #tpu.dot_dimension_numbers<[1], [0], [0], [1], [0, 0, 1, 1], [], []>} : vector<512x48xbf16>, vector<48x128xbf16>, vector<512x128xf32> -> vector<512x128xf32>
    %c0_4 = arith.constant 0 : index
    %c0_5 = arith.constant 0 : index
    %4 = vector.load %arg4[%c0_4, %c0_5] : memref<1x128xf32, #tpu.memory_space<vmem>>, vector<1x128xf32>
    %5 = vector.broadcast %4 : vector<1x128xf32> to vector<512x128xf32>
    %6 = arith.addf %3, %5 : vector<512x128xf32>
    %cst_6 = arith.constant 0.000000e+00 : f32
    %7 = vector.broadcast %cst_6 : f32 to vector<512x128xf32>
    %8 = arith.maximumf %6, %7 : vector<512x128xf32>
    %9 = vector.shape_cast %8 : vector<512x128xf32> to vector<2x256x128xf32>
    %cst_7 = arith.constant dense<0.000000e+00> : vector<2x128xf32>
    %10 = vector.multi_reduction <add>, %9, %cst_7 [1] : vector<2x256x128xf32> to vector<2x128xf32>
    %cst_8 = arith.constant 3.906250e-03 : f32
    %11 = vector.broadcast %cst_8 : f32 to vector<2x128xf32>
    %12 = arith.mulf %10, %11 : vector<2x128xf32>
    %c0_9 = arith.constant 0 : index
    %c0_10 = arith.constant 0 : index
    %13 = vector.load %arg5[%c0_9, %c0_10] : memref<128x128xf32, #tpu.memory_space<vmem>>, vector<128x128xf32>
    %cst_11 = arith.constant dense<0.000000e+00> : vector<2x128xf32>
    %14 = tpu.matmul %12, %13, %cst_11 {dimension_numbers = #tpu.dot_dimension_numbers<[1], [0], [0], [1], [0, 0, 1, 1], [], []>} : vector<2x128xf32>, vector<128x128xf32>, vector<2x128xf32> -> vector<2x128xf32>
    %c0_12 = arith.constant 0 : index
    %c0_13 = arith.constant 0 : index
    %15 = vector.load %arg6[%c0_12, %c0_13] : memref<1x128xf32, #tpu.memory_space<vmem>>, vector<1x128xf32>
    %16 = vector.broadcast %15 : vector<1x128xf32> to vector<2x128xf32>
    %17 = arith.addf %14, %16 : vector<2x128xf32>
    %c0_14 = arith.constant 0 : index
    %c0_15 = arith.constant 0 : index
    %18 = vector.load %arg7[%c0_14, %c0_15] : memref<2x128xf32, #tpu.memory_space<vmem>>, vector<2x128xf32>
    tpu.vector_store %arg7[%c0_14, %c0_15], %17 {strides = array<i32>} : memref<2x128xf32, #tpu.memory_space<vmem>>, vector<2x128xf32>,
    return
  }
  func.func @transform_0(%arg0: i32, %arg1: i32) -> (i32, i32, i32) {
    %c0_i32 = arith.constant 0 : i32
    %c0_i32_0 = arith.constant 0 : i32
    return %arg0, %arg1, %c0_i32 : i32, i32, i32
  }
  func.func @transform_1(%arg0: i32, %arg1: i32) -> (i32, i32) {
    %c0_i32 = arith.constant 0 : i32
    %c0_i32_0 = arith.constant 0 : i32
    %c0_i32_1 = arith.constant 0 : i32
    return %c0_i32, %c0_i32_0 : i32, i32
  }
  func.func @transform_2(%arg0: i32, %arg1: i32) -> (i32, i32) {
    %c0_i32 = arith.constant 0 : i32
    %c0_i32_0 = arith.constant 0 : i32
    %c0_i32_1 = arith.constant 0 : i32
    return %c0_i32, %c0_i32_0 : i32, i32
  }
  func.func @transform_3(%arg0: i32, %arg1: i32) -> (i32, i32) {
    %c0_i32 = arith.constant 0 : i32
    %c0_i32_0 = arith.constant 0 : i32
    %c0_i32_1 = arith.constant 0 : i32
    return %c0_i32, %c0_i32_0 : i32, i32
  }
  func.func @transform_4(%arg0: i32, %arg1: i32) -> (i32, i32) {
    %c0_i32 = arith.constant 0 : i32
    %c0_i32_0 = arith.constant 0 : i32
    %c0_i32_1 = arith.constant 0 : i32
    return %c0_i32, %c0_i32_0 : i32, i32
  }
  func.func @transform_5(%arg0: i32, %arg1: i32) -> (i32, i32) {
    %c0_i32 = arith.constant 0 : i32
    %c0_i32_0 = arith.constant 0 : i32
    return %arg0, %c0_i32 : i32, i32
  }
}

</mosaic_0001>

<llo_original>
// kernel: tpu_custom_call.1
$region0: #{tpu_custom_call.1}
  #allocation0 [shape = 'u32[]', space=smem, size = 0x4, offset = 0x4, fixed_abs, tag = 'smem constant byte address 0x4 - core index']
  #allocation1 [shape = 'u32[144,128]{1,0:T(1,128)}', space=vmem, size = 0x12000, scoped, tag = 'internal scratch']
  #allocation2 [shape = 'f32[2,128]{1,0:T(2,128)}', space=vmem, size = 0x400, scoped, tag = 'scratch operand']
  %s0 = inlined_call_operand.vmem [shape: bf16[2,256,48], index: 0, kind: input, shape index: {}]
  %s1 = inlined_call_operand.vmem [shape: bf16[48,128], index: 1, kind: input, shape index: {}]
  %s2 = inlined_call_operand.vmem [shape: f32[1,128], index: 2, kind: input, shape index: {}]
  %s3 = inlined_call_operand.vmem [shape: f32[128,128], index: 3, kind: input, shape index: {}]
  %s4 = inlined_call_operand.vmem [shape: f32[1,128], index: 4, kind: input, shape index: {}]
  %s5 = inlined_call_operand.hbm [shape: f32[2,128], index: 5, kind: output, shape index: {}]
  %s6 = sld [smem:[#allocation0]]
  $region30: #{tpu_custom_call.1} parent=0
    _
  %s8 = ssub.s32 1, %s6
  %s9 = scalar_select 0, %s8, %s6
  $region1: #{tpu_custom_call.1} parent=0
    #allocation3 [shape = 'u8[1024]{0}', space=vmem, size = 0x400, scoped, tag = 'output window, operand 0, single buffered']
    #allocation4 [shape = 's32[1]{0}', space=sflag, size = 0x4, scoped, tag = 'scoped memory for tpu_custom_call.1']
    %10 = vsyncpa [#allocation4], 0
    // Predicated region
    $region2: #{tpu_custom_call.1} parent=1 // pred_check
      _
    $region3: #{tpu_custom_call.1} parent=1 // pred_check_branch
      %12 = sbr.rel (0) target = $region5
    $region4: #{tpu_custom_call.1} parent=1 // pred_region
      _
    $region5: #{tpu_custom_call.1} parent=1 // pred_fallthru
      _
    // Predicated region
    $region6: #{tpu_custom_call.1} parent=1 // pred_check
      _
    $region7: #{tpu_custom_call.1} parent=1 // pred_check_branch
      %14 = sbr.rel (0) target = $region9
    $region8: #{tpu_custom_call.1} parent=1 // pred_region
      _
    $region9: #{tpu_custom_call.1} parent=1 // pred_fallthru
      _
    // Predicated region
    $region10: #{tpu_custom_call.1} parent=1 // pred_check
      _
    $region11: #{tpu_custom_call.1} parent=1 // pred_check_branch
      %16 = sbr.rel (0) target = $region13
    $region12: #{tpu_custom_call.1} parent=1 // pred_region
      _
    $region13: #{tpu_custom_call.1} parent=1 // pred_fallthru
      _
    // Predicated region
    $region14: #{tpu_custom_call.1} parent=1 // pred_check
      _
    $region15: #{tpu_custom_call.1} parent=1 // pred_check_branch
      %18 = sbr.rel (0) target = $region17
    $region16: #{tpu_custom_call.1} parent=1 // pred_region
      _
    $region17: #{tpu_custom_call.1} parent=1 // pred_fallthru
      _
    // Predicated region
    $region18: #{tpu_custom_call.1} parent=1 // pred_check
      _
    $region19: #{tpu_custom_call.1} parent=1 // pred_check_branch
      %20 = sbr.rel (0) target = $region21
    $region20: #{tpu_custom_call.1} parent=1 // pred_region
      _
    $region21: #{tpu_custom_call.1} parent=1 // pred_fallthru
      _
    %v22 = vld [vmem:[%s0] sm:$0xf]
    %v23 = vld [vmem:[%s0 + $0x4] sm:$0xf]
    %v24 = vld [vmem:[%s0 + $0x8] sm:$0xf]
    %v25 = vld [vmem:[%s0 + $0xc] sm:$0xf]
    %v26 = vld [vmem:[%s0 + $0x10] sm:$0xf]
    %v27 = vld [vmem:[%s0 + $0x14] sm:$0xf]
    %v28 = vld [vmem:[%s0 + $0x18] sm:$0xf]
    %v29 = vld [vmem:[%s0 + $0x1c] sm:$0xf]
    %v30 = vld [vmem:[%s0 + $0x20] sm:$0xf]
    %v31 = vld [vmem:[%s0 + $0x24] sm:$0xf]
    %v32 = vld [vmem:[%s0 + $0x28] sm:$0xf]
    %v33 = vld [vmem:[%s0 + $0x2c] sm:$0xf]
    %v34 = vld [vmem:[%s0 + $0x30] sm:$0xf]
    %v35 = vld [vmem:[%s0 + $0x34] sm:$0xf]
    %v36 = vld [vmem:[%s0 + $0x38] sm:$0xf]
    %v37 = vld [vmem:[%s0 + $0x3c] sm:$0xf]
    %v38 = vld [vmem:[%s0 + $0x40] sm:$0xf]
    %v39 = vld [vmem:[%s0 + $0x44] sm:$0xf]
    %v40 = vld [vmem:[%s0 + $0x48] sm:$0xf]
    %v41 = vld [vmem:[%s0 + $0x4c] sm:$0xf]
    %v42 = vld [vmem:[%s0 + $0x50] sm:$0xf]
    %v43 = vld [vmem:[%s0 + $0x54] sm:$0xf]
    %v44 = vld [vmem:[%s0 + $0x58] sm:$0xf]
    %v45 = vld [vmem:[%s0 + $0x5c] sm:$0xf]
    %v46 = vld [vmem:[%s0 + $0x60] sm:$0xf]
    %v47 = vld [vmem:[%s0 + $0x64] sm:$0xf]
    %v48 = vld [vmem:[%s0 + $0x68] sm:$0xf]
    %v49 = vld [vmem:[%s0 + $0x6c] sm:$0xf]
    %v50 = vld [vmem:[%s0 + $0x70] sm:$0xf]
    %v51 = vld [vmem:[%s0 + $0x74] sm:$0xf]
    %v52 = vld [vmem:[%s0 + $0x78] sm:$0xf]
    %v53 = vld [vmem:[%s0 + $0x7c] sm:$0xf]
    %v54 = vld [vmem:[%s0 + $0x80] sm:$0xf]
    %v55 = vld [vmem:[%s0 + $0x84] sm:$0xf]
    %v56 = vld [vmem:[%s0 + $0x88] sm:$0xf]
    %v57 = vld [vmem:[%s0 + $0x8c] sm:$0xf]
    %v58 = vld [vmem:[%s0 + $0x90] sm:$0xf]
    %v59 = vld [vmem:[%s0 + $0x94] sm:$0xf]
    %v60 = vld [vmem:[%s0 + $0x98] sm:$0xf]
    %v61 = vld [vmem:[%s0 + $0x9c] sm:$0xf]
    %v62 = vld [vmem:[%s0 + $0xa0] sm:$0xf]
    %v63 = vld [vmem:[%s0 + $0xa4] sm:$0xf]
    %v64 = vld [vmem:[%s0 + $0xa8] sm:$0xf]
    %v65 = vld [vmem:[%s0 + $0xac] sm:$0xf]
    %v66 = vld [vmem:[%s0 + $0xb0] sm:$0xf]
    %v67 = vld [vmem:[%s0 + $0xb4] sm:$0xf]
    %v68 = vld [vmem:[%s0 + $0xb8] sm:$0xf]
    %v69 = vld [vmem:[%s0 + $0xbc] sm:$0xf]
    %v70 = vld [vmem:[%s0 + $0xc0] sm:$0xf]
    %v71 = vld [vmem:[%s0 + $0xc4] sm:$0xf]
    %v72 = vld [vmem:[%s0 + $0xc8] sm:$0xf]
    %v73 = vld [vmem:[%s0 + $0xcc] sm:$0xf]
    %v74 = vld [vmem:[%s0 + $0xd0] sm:$0xf]
    %v75 = vld [vmem:[%s0 + $0xd4] sm:$0xf]
    %v76 = vld [vmem:[%s0 + $0xd8] sm:$0xf]
    %v77 = vld [vmem:[%s0 + $0xdc] sm:$0xf]
    %v78 = vld [vmem:[%s0 + $0xe0] sm:$0xf]
    %v79 = vld [vmem:[%s0 + $0xe4] sm:$0xf]
    %v80 = vld [vmem:[%s0 + $0xe8] sm:$0xf]
    %v81 = vld [vmem:[%s0 + $0xec] sm:$0xf]
    %v82 = vld [vmem:[%s0 + $0xf0] sm:$0xf]
    %v83 = vld [vmem:[%s0 + $0xf4] sm:$0xf]
    %v84 = vld [vmem:[%s0 + $0xf8] sm:$0xf]
    %v85 = vld [vmem:[%s0 + $0xfc] sm:$0xf]
    %v86 = vld [vmem:[%s1] sm:$0xf]
    %v87 = vld [vmem:[%s1 + $0x4] sm:$0xf]
    %v88 = vld [vmem:[%s1 + $0x8] sm:$0xf]
    %v89 = vld [vmem:[%s1 + $0xc] sm:$0xf]
    %v90 = vld [vmem:[%s1 + $0x10] sm:$0xf]
    %v91 = vld [vmem:[%s1 + $0x14] sm:$0xf]
    %v92 = vld [vmem:[%s2] sm:$0x1]
    %v94 = vlaneseq
    %v95 = vshrl.u32 %v94, 7
    %v96 = vsub.s32 0, %v95
    %v97 = vrot.slane %v92, %v96
    %v163 = vunpack.c.l.b16 %v22
    %v164 = vunpack.c.l.b16 %v23
    %v165 = vunpack.c.l.b16 %v24
    %v166 = vunpack.c.l.b16 %v25
    %v167 = vunpack.c.l.b16 %v26
    %v168 = vunpack.c.l.b16 %v27
    %v169 = vunpack.c.l.b16 %v28
    %v170 = vunpack.c.l.b16 %v29
    %v171 = vunpack.c.l.b16 %v30
    %v172 = vunpack.c.l.b16 %v31
    %v173 = vunpack.c.l.b16 %v32
    %v174 = vunpack.c.l.b16 %v33
    %v175 = vunpack.c.l.b16 %v34
    %v176 = vunpack.c.l.b16 %v35
    %v177 = vunpack.c.l.b16 %v36
    %v178 = vunpack.c.l.b16 %v37
    %v179 = vunpack.c.l.b16 %v38
    %v180 = vunpack.c.l.b16 %v39
    %v181 = vunpack.c.l.b16 %v40
    %v182 = vunpack.c.l.b16 %v41
    %v183 = vunpack.c.l.b16 %v42
    %v184 = vunpack.c.l.b16 %v43
    %v185 = vunpack.c.l.b16 %v44
    %v186 = vunpack.c.l.b16 %v45
    %v187 = vunpack.c.l.b16 %v46
    %v188 = vunpack.c.l.b16 %v47
    %v189 = vunpack.c.l.b16 %v48
    %v190 = vunpack.c.l.b16 %v49
    %v191 = vunpack.c.l.b16 %v50
    %v192 = vunpack.c.l.b16 %v51
    %v193 = vunpack.c.l.b16 %v52
    %v194 = vunpack.c.l.b16 %v53
    %v195 = vunpack.c.l.b16 %v54
    %v196 = vunpack.c.l.b16 %v55
    %v197 = vunpack.c.l.b16 %v56
    %v198 = vunpack.c.l.b16 %v57
    %v199 = vunpack.c.l.b16 %v58
    %v200 = vunpack.c.l.b16 %v59
    %v201 = vunpack.c.l.b16 %v60
    %v202 = vunpack.c.l.b16 %v61
    %v203 = vunpack.c.l.b16 %v62
    %v204 = vunpack.c.l.b16 %v63
    %v205 = vunpack.c.l.b16 %v64
    %v206 = vunpack.c.l.b16 %v65
    %v207 = vunpack.c.l.b16 %v66
    %v208 = vunpack.c.l.b16 %v67
    %v209 = vunpack.c.l.b16 %v68
    %v210 = vunpack.c.l.b16 %v69
    %v211 = vunpack.c.l.b16 %v70
    %v212 = vunpack.c.l.b16 %v71
    %v213 = vunpack.c.l.b16 %v72
    %v214 = vunpack.c.l.b16 %v73
    %v215 = vunpack.c.l.b16 %v74
    %v216 = vunpack.c.l.b16 %v75
    %v217 = vunpack.c.l.b16 %v76
    %v218 = vunpack.c.l.b16 %v77
    %v219 = vunpack.c.l.b16 %v78
    %v220 = vunpack.c.l.b16 %v79
    %v221 = vunpack.c.l.b16 %v80
    %v222 = vunpack.c.l.b16 %v81
    %v223 = vunpack.c.l.b16 %v82
    %v224 = vunpack.c.l.b16 %v83
    %v225 = vunpack.c.l.b16 %v84
    %v226 = vunpack.c.l.b16 %v85
    %v227 = vpack.c.b16 %v164, %v163
    %v228 = vpack.c.b16 %v166, %v165
    %v229 = vpack.c.b16 %v168, %v167
    %v230 = vpack.c.b16 %v170, %v169
    %v231 = vpack.c.b16 %v172, %v171
    %v232 = vpack.c.b16 %v174, %v173
    %v233 = vpack.c.b16 %v176, %v175
    %v234 = vpack.c.b16 %v178, %v177
    %v235 = vpack.c.b16 %v180, %v179
    %v236 = vpack.c.b16 %v182, %v181
    %v237 = vpack.c.b16 %v184, %v183
    %v238 = vpack.c.b16 %v186, %v185
    %v239 = vpack.c.b16 %v188, %v187
    %v240 = vpack.c.b16 %v190, %v189
    %v241 = vpack.c.b16 %v192, %v191
    %v242 = vpack.c.b16 %v194, %v193
    %v243 = vpack.c.b16 %v196, %v195
    %v244 = vpack.c.b16 %v198, %v197
    %v245 = vpack.c.b16 %v200, %v199
    %v246 = vpack.c.b16 %v202, %v201
    %v247 = vpack.c.b16 %v204, %v203
    %v248 = vpack.c.b16 %v206, %v205
    %v249 = vpack.c.b16 %v208, %v207
    %v250 = vpack.c.b16 %v210, %v209
    %v251 = vpack.c.b16 %v212, %v211
    %v252 = vpack.c.b16 %v214, %v213
    %v253 = vpack.c.b16 %v216, %v215
    %v254 = vpack.c.b16 %v218, %v217
    %v255 = vpack.c.b16 %v220, %v219
    %v256 = vpack.c.b16 %v222, %v221
    %v257 = vpack.c.b16 %v224, %v223
    %v258 = vpack.c.b16 %v226, %v225
    %v265 = vunpack.c.l.b16 %v86
    %v266 = vunpack.c.l.b16 %v87
    %v267 = vunpack.c.l.b16 %v88
    %v268 = vunpack.c.l.b16 %v89
    %v269 = vunpack.c.l.b16 %v90
    %v270 = vunpack.c.l.b16 %v91
    %v271 = vpack.c.b16 %v266, %v265
    %v272 = vpack.c.b16 %v268, %v267
    %v273 = vpack.c.b16 %v270, %v269
    %vm277 = vcmask 392192
    %v279 = vsel %vm277, %v227, 0
    %v282 = vsel %vm277, %v228, 0
    %v285 = vsel %vm277, %v229, 0
    %v288 = vsel %vm277, %v230, 0
    %v291 = vsel %vm277, %v231, 0
    %v294 = vsel %vm277, %v232, 0
    %v297 = vsel %vm277, %v233, 0
    %v300 = vsel %vm277, %v234, 0
    %v303 = vsel %vm277, %v235, 0
    %v306 = vsel %vm277, %v236, 0
    %v309 = vsel %vm277, %v237, 0
    %v312 = vsel %vm277, %v238, 0
    %v315 = vsel %vm277, %v239, 0
    %v318 = vsel %vm277, %v240, 0
    %v321 = vsel %vm277, %v241, 0
    %v324 = vsel %vm277, %v242, 0
    %v327 = vsel %vm277, %v243, 0
    %v330 = vsel %vm277, %v244, 0
    %v333 = vsel %vm277, %v245, 0
    %v336 = vsel %vm277, %v246, 0
    %v339 = vsel %vm277, %v247, 0
    %v342 = vsel %vm277, %v248, 0
    %v345 = vsel %vm277, %v249, 0
    %v348 = vsel %vm277, %v250, 0
    %v351 = vsel %vm277, %v251, 0
    %v354 = vsel %vm277, %v252, 0
    %v357 = vsel %vm277, %v253, 0
    %v360 = vsel %vm277, %v254, 0
    %v363 = vsel %vm277, %v255, 0
    %v366 = vsel %vm277, %v256, 0
    %v369 = vsel %vm277, %v257, 0
    %v372 = vsel %vm277, %v258, 0
    %374 = vmatprep.subr.bf16.mxu0 0
    %375 = vmatpush1.bf16.msra.mxu0 0
    %376 = vmatprep.subr.bf16.mxu0 0
    %377 = vmatpush1.bf16.msra.mxu0 0
    %378 = vmatprep.subr.bf16.mxu0 0
    %379 = vmatpush1.bf16.msra.mxu0 0
    %380 = vmatprep.subr.bf16.mxu0 0
    %381 = vmatpush1.bf16.msra.mxu0 0
    %382 = vmatprep.subr.bf16.mxu0 0
    %383 = vmatpush1.bf16.msra.mxu0 0
    %384 = vmatprep.subr.bf16.mxu0 0
    %385 = vmatpush1.bf16.msra.mxu0 %v273
    %386 = vmatprep.subr.bf16.mxu0 0
    %387 = vmatpush1.bf16.msra.mxu0 %v272
    %388 = vmatprep.subr.bf16.mxu0 0
    %389 = vmatpush1.bf16.msra.mxu0 %v271
    %390 = vmatprep.subr.bf16.mxu0 0
    %391 = vmatpush2.bf16.msra.mxu0 0
    %392 = vmatprep.subr.bf16.mxu0 0
    %393 = vmatpush2.bf16.msra.mxu0 0
    %394 = vmatprep.subr.bf16.mxu0 0
    %395 = vmatpush2.bf16.msra.mxu0 0
    %396 = vmatprep.subr.bf16.mxu0 0
    %397 = vmatpush2.bf16.msra.mxu0 0
    %398 = vmatprep.subr.bf16.mxu0 0
    %399 = vmatpush2.bf16.msra.mxu0 0
    %400 = vmatprep.subr.bf16.mxu0 0
    %401 = vmatpush2.bf16.msra.mxu0 0
    %402 = vmatprep.subr.bf16.mxu0 0
    %403 = vmatpush2.bf16.msra.mxu0 0
    %404 = vmatprep.subr.bf16.mxu0 0
    %405 = vmatpush2.bf16.msra.mxu0 0
    %406 = vmatprep.mubr.bf16.mxu0 0
    %407 = vmatmul.mubr.bf16.gmra.mxu0 %v279
    %v408 = vpop.f32.mrf.mxu0
    %v409 = vadd.f32 %v97, %v408
    %v410 = vpop.f32.mrf.mxu0
    %v411 = vpop.f32.mrf.mxu0
    %v412 = vadd.f32 %v97, %v411
    %v413 = vpop.f32.mrf.mxu0
    %414 = vmatprep.mubr.bf16.mxu0 0
    %415 = vmatmul.mubr.bf16.gmra.mxu0 %v282
    %v416 = vpop.f32.mrf.mxu0
    %v417 = vadd.f32 %v97, %v416
    %v418 = vpop.f32.mrf.mxu0
    %v419 = vpop.f32.mrf.mxu0
    %v420 = vadd.f32 %v97, %v419
    %v421 = vpop.f32.mrf.mxu0
    %422 = vmatprep.mubr.bf16.mxu0 0
    %423 = vmatmul.mubr.bf16.gmra.mxu0 %v285
    %v424 = vpop.f32.mrf.mxu0
    %v425 = vadd.f32 %v97, %v424
    %v426 = vpop.f32.mrf.mxu0
    %v427 = vpop.f32.mrf.mxu0
    %v428 = vadd.f32 %v97, %v427
    %v429 = vpop.f32.mrf.mxu0
    %430 = vmatprep.mubr.bf16.mxu0 0
    %431 = vmatmul.mubr.bf16.gmra.mxu0 %v288
    %v432 = vpop.f32.mrf.mxu0
    %v433 = vadd.f32 %v97, %v432
    %v434 = vpop.f32.mrf.mxu0
    %v435 = vpop.f32.mrf.mxu0
    %v436 = vadd.f32 %v97, %v435
    %v437 = vpop.f32.mrf.mxu0
    %438 = vmatprep.mubr.bf16.mxu0 0
    %439 = vmatmul.mubr.bf16.gmra.mxu0 %v291
    %v440 = vpop.f32.mrf.mxu0
    %v441 = vadd.f32 %v97, %v440
    %v442 = vpop.f32.mrf.mxu0
    %v443 = vpop.f32.mrf.mxu0
    %v444 = vadd.f32 %v97, %v443
    %v445 = vpop.f32.mrf.mxu0
    %446 = vmatprep.mubr.bf16.mxu0 0
    %447 = vmatmul.mubr.bf16.gmra.mxu0 %v294
    %v448 = vpop.f32.mrf.mxu0
    %v449 = vadd.f32 %v97, %v448
    %v450 = vpop.f32.mrf.mxu0
    %v451 = vpop.f32.mrf.mxu0
    %v452 = vadd.f32 %v97, %v451
    %v453 = vpop.f32.mrf.mxu0
    %454 = vmatprep.mubr.bf16.mxu0 0
    %455 = vmatmul.mubr.bf16.gmra.mxu0 %v297
    %v456 = vpop.f32.mrf.mxu0
    %v457 = vadd.f32 %v97, %v456
    %v458 = vpop.f32.mrf.mxu0
    %v459 = vpop.f32.mrf.mxu0
    %v460 = vadd.f32 %v97, %v459
    %v461 = vpop.f32.mrf.mxu0
    %462 = vmatprep.mubr.bf16.mxu0 0
    %463 = vmatmul.mubr.bf16.gmra.mxu0 %v300
    %v464 = vpop.f32.mrf.mxu0
    %v465 = vadd.f32 %v97, %v464
    %v466 = vpop.f32.mrf.mxu0
    %v467 = vpop.f32.mrf.mxu0
    %v468 = vadd.f32 %v97, %v467
    %v469 = vpop.f32.mrf.mxu0
    %470 = vmatprep.mubr.bf16.mxu0 0
    %471 = vmatmul.mubr.bf16.gmra.mxu0 %v303
    %v472 = vpop.f32.mrf.mxu0
    %v473 = vadd.f32 %v97, %v472
    %v474 = vpop.f32.mrf.mxu0
    %v475 = vpop.f32.mrf.mxu0
    %v476 = vadd.f32 %v97, %v475
    %v477 = vpop.f32.mrf.mxu0
    %478 = vmatprep.mubr.bf16.mxu0 0
    %479 = vmatmul.mubr.bf16.gmra.mxu0 %v306
    %v480 = vpop.f32.mrf.mxu0
    %v481 = vadd.f32 %v97, %v480
    %v482 = vpop.f32.mrf.mxu0
    %v483 = vpop.f32.mrf.mxu0
    %v484 = vadd.f32 %v97, %v483
    %v485 = vpop.f32.mrf.mxu0
    %486 = vmatprep.mubr.bf16.mxu0 0
    %487 = vmatmul.mubr.bf16.gmra.mxu0 %v309
    %v488 = vpop.f32.mrf.mxu0
    %v489 = vadd.f32 %v97, %v488
    %v490 = vpop.f32.mrf.mxu0
    %v491 = vpop.f32.mrf.mxu0
    %v492 = vadd.f32 %v97, %v491
    %v493 = vpop.f32.mrf.mxu0
    %494 = vmatprep.mubr.bf16.mxu0 0
    %495 = vmatmul.mubr.bf16.gmra.mxu0 %v312
    %v496 = vpop.f32.mrf.mxu0
    %v497 = vadd.f32 %v97, %v496
    %v498 = vpop.f32.mrf.mxu0
    %v499 = vpop.f32.mrf.mxu0
    %v500 = vadd.f32 %v97, %v499
    %v501 = vpop.f32.mrf.mxu0
    %502 = vmatprep.mubr.bf16.mxu0 0
    %503 = vmatmul.mubr.bf16.gmra.mxu0 %v315
    %v504 = vpop.f32.mrf.mxu0
    %v505 = vadd.f32 %v97, %v504
    %v506 = vpop.f32.mrf.mxu0
    %v507 = vpop.f32.mrf.mxu0
    %v508 = vadd.f32 %v97, %v507
    %v509 = vpop.f32.mrf.mxu0
    %510 = vmatprep.mubr.bf16.mxu0 0
    %511 = vmatmul.mubr.bf16.gmra.mxu0 %v318
    %v512 = vpop.f32.mrf.mxu0
    %v513 = vadd.f32 %v97, %v512
    %v514 = vpop.f32.mrf.mxu0
    %v515 = vpop.f32.mrf.mxu0
    %v516 = vadd.f32 %v97, %v515
    %v517 = vpop.f32.mrf.mxu0
    %518 = vmatprep.mubr.bf16.mxu0 0
    %519 = vmatmul.mubr.bf16.gmra.mxu0 %v321
    %v520 = vpop.f32.mrf.mxu0
    %v521 = vadd.f32 %v97, %v520
    %v522 = vpop.f32.mrf.mxu0
    %v523 = vpop.f32.mrf.mxu0
    %v524 = vadd.f32 %v97, %v523
    %v525 = vpop.f32.mrf.mxu0
    %526 = vmatprep.mubr.bf16.mxu0 0
    %527 = vmatmul.mubr.bf16.gmra.mxu0 %v324
    %v528 = vpop.f32.mrf.mxu0
    %v529 = vadd.f32 %v97, %v528
    %v530 = vpop.f32.mrf.mxu0
    %v531 = vpop.f32.mrf.mxu0
    %v532 = vadd.f32 %v97, %v531
    %v533 = vpop.f32.mrf.mxu0
    %534 = vmatprep.mubr.bf16.mxu0 0
    %535 = vmatmul.mubr.bf16.gmra.mxu0 %v327
    %v536 = vpop.f32.mrf.mxu0
    %v537 = vadd.f32 %v97, %v536
    %v538 = vpop.f32.mrf.mxu0
    %v539 = vpop.f32.mrf.mxu0
    %v540 = vadd.f32 %v97, %v539
    %v541 = vpop.f32.mrf.mxu0
    %542 = vmatprep.mubr.bf16.mxu0 0
    %543 = vmatmul.mubr.bf16.gmra.mxu0 %v330
    %v544 = vpop.f32.mrf.mxu0
    %v545 = vadd.f32 %v97, %v544
    %v546 = vpop.f32.mrf.mxu0
    %v547 = vpop.f32.mrf.mxu0
    %v548 = vadd.f32 %v97, %v547
    %v549 = vpop.f32.mrf.mxu0
    %550 = vmatprep.mubr.bf16.mxu0 0
    %551 = vmatmul.mubr.bf16.gmra.mxu0 %v333
    %v552 = vpop.f32.mrf.mxu0
    %v553 = vadd.f32 %v97, %v552
    %v554 = vpop.f32.mrf.mxu0
    %v555 = vpop.f32.mrf.mxu0
    %v556 = vadd.f32 %v97, %v555
    %v557 = vpop.f32.mrf.mxu0
    %558 = vmatprep.mubr.bf16.mxu0 0
    %559 = vmatmul.mubr.bf16.gmra.mxu0 %v336
    %v560 = vpop.f32.mrf.mxu0
    %v561 = vadd.f32 %v97, %v560
    %v562 = vpop.f32.mrf.mxu0
    %v563 = vpop.f32.mrf.mxu0
    %v564 = vadd.f32 %v97, %v563
    %v565 = vpop.f32.mrf.mxu0
    %566 = vmatprep.mubr.bf16.mxu0 0
    %567 = vmatmul.mubr.bf16.gmra.mxu0 %v339
    %v568 = vpop.f32.mrf.mxu0
    %v569 = vadd.f32 %v97, %v568
    %v570 = vpop.f32.mrf.mxu0
    %v571 = vpop.f32.mrf.mxu0
    %v572 = vadd.f32 %v97, %v571
    %v573 = vpop.f32.mrf.mxu0
    %574 = vmatprep.mubr.bf16.mxu0 0
    %575 = vmatmul.mubr.bf16.gmra.mxu0 %v342
    %v576 = vpop.f32.mrf.mxu0
    %v577 = vadd.f32 %v97, %v576
    %v578 = vpop.f32.mrf.mxu0
    %v579 = vpop.f32.mrf.mxu0
    %v580 = vadd.f32 %v97, %v579
    %v581 = vpop.f32.mrf.mxu0
    %582 = vmatprep.mubr.bf16.mxu0 0
    %583 = vmatmul.mubr.bf16.gmra.mxu0 %v345
    %v584 = vpop.f32.mrf.mxu0
    %v585 = vadd.f32 %v97, %v584
    %v586 = vpop.f32.mrf.mxu0
    %v587 = vpop.f32.mrf.mxu0
    %v588 = vadd.f32 %v97, %v587
    %v589 = vpop.f32.mrf.mxu0
    %590 = vmatprep.mubr.bf16.mxu0 0
    %591 = vmatmul.mubr.bf16.gmra.mxu0 %v348
    %v592 = vpop.f32.mrf.mxu0
    %v593 = vadd.f32 %v97, %v592
    %v594 = vpop.f32.mrf.mxu0
    %v595 = vpop.f32.mrf.mxu0
    %v596 = vadd.f32 %v97, %v595
    %v597 = vpop.f32.mrf.mxu0
    %598 = vmatprep.mubr.bf16.mxu0 0
    %599 = vmatmul.mubr.bf16.gmra.mxu0 %v351
    %v600 = vpop.f32.mrf.mxu0
    %v601 = vadd.f32 %v97, %v600
    %v602 = vpop.f32.mrf.mxu0
    %v603 = vpop.f32.mrf.mxu0
    %v604 = vadd.f32 %v97, %v603
    %v605 = vpop.f32.mrf.mxu0
    %606 = vmatprep.mubr.bf16.mxu0 0
    %607 = vmatmul.mubr.bf16.gmra.mxu0 %v354
    %v608 = vpop.f32.mrf.mxu0
    %v609 = vadd.f32 %v97, %v608
    %v610 = vpop.f32.mrf.mxu0
    %v611 = vpop.f32.mrf.mxu0
    %v612 = vadd.f32 %v97, %v611
    %v613 = vpop.f32.mrf.mxu0
    %614 = vmatprep.mubr.bf16.mxu0 0
    %615 = vmatmul.mubr.bf16.gmra.mxu0 %v357
    %v616 = vpop.f32.mrf.mxu0
    %v617 = vadd.f32 %v97, %v616
    %v618 = vpop.f32.mrf.mxu0
    %v619 = vpop.f32.mrf.mxu0
    %v620 = vadd.f32 %v97, %v619
    %v621 = vpop.f32.mrf.mxu0
    %622 = vmatprep.mubr.bf16.mxu0 0
    %623 = vmatmul.mubr.bf16.gmra.mxu0 %v360
    %v624 = vpop.f32.mrf.mxu0
    %v625 = vadd.f32 %v97, %v624
    %v626 = vpop.f32.mrf.mxu0
    %v627 = vpop.f32.mrf.mxu0
    %v628 = vadd.f32 %v97, %v627
    %v629 = vpop.f32.mrf.mxu0
    %630 = vmatprep.mubr.bf16.mxu0 0
    %631 = vmatmul.mubr.bf16.gmra.mxu0 %v363
    %v632 = vpop.f32.mrf.mxu0
    %v633 = vadd.f32 %v97, %v632
    %v634 = vpop.f32.mrf.mxu0
    %v635 = vpop.f32.mrf.mxu0
    %v636 = vadd.f32 %v97, %v635
    %v637 = vpop.f32.mrf.mxu0
    %638 = vmatprep.mubr.bf16.mxu0 0
    %639 = vmatmul.mubr.bf16.gmra.mxu0 %v366
    %v640 = vpop.f32.mrf.mxu0
    %v641 = vadd.f32 %v97, %v640
    %v642 = vpop.f32.mrf.mxu0
    %v643 = vpop.f32.mrf.mxu0
    %v644 = vadd.f32 %v97, %v643
    %v645 = vpop.f32.mrf.mxu0
    %646 = vmatprep.mubr.bf16.mxu0 0
    %647 = vmatmul.mubr.bf16.gmra.mxu0 %v369
    %v648 = vpop.f32.mrf.mxu0
    %v649 = vadd.f32 %v97, %v648
    %v650 = vpop.f32.mrf.mxu0
    %v651 = vpop.f32.mrf.mxu0
    %v652 = vadd.f32 %v97, %v651
    %v653 = vpop.f32.mrf.mxu0
    %654 = vmatprep.mubr.bf16.mxu0 0
    %655 = vmatmul.mubr.bf16.gmra.mxu0 %v372
    %v656 = vpop.f32.mrf.mxu0
    %v657 = vadd.f32 %v97, %v656
    %v658 = vpop.f32.mrf.mxu0
    %v659 = vpop.f32.mrf.mxu0
    %v660 = vadd.f32 %v97, %v659
    %v661 = vpop.f32.mrf.mxu0
    %662 = vdwg.mxu0
    %v663 = vmax.f32 %v409, 0.0
    %v664 = vmax.f32 %v412, 0.0
    %v665 = vmax.f32 %v417, 0.0
    %v666 = vmax.f32 %v420, 0.0
    %v667 = vmax.f32 %v425, 0.0
    %v668 = vmax.f32 %v428, 0.0
    %v669 = vmax.f32 %v433, 0.0
    %v670 = vmax.f32 %v436, 0.0
    %v671 = vmax.f32 %v441, 0.0
    %v672 = vmax.f32 %v444, 0.0
    %v673 = vmax.f32 %v449, 0.0
    %v674 = vmax.f32 %v452, 0.0
    %v675 = vmax.f32 %v457, 0.0
    %v676 = vmax.f32 %v460, 0.0
    %v677 = vmax.f32 %v465, 0.0
    %v678 = vmax.f32 %v468, 0.0
    %v679 = vmax.f32 %v473, 0.0
    %v680 = vmax.f32 %v476, 0.0
    %v681 = vmax.f32 %v481, 0.0
    %v682 = vmax.f32 %v484, 0.0
    %v683 = vmax.f32 %v489, 0.0
    %v684 = vmax.f32 %v492, 0.0
    %v685 = vmax.f32 %v497, 0.0
    %v686 = vmax.f32 %v500, 0.0
    %v687 = vmax.f32 %v505, 0.0
    %v688 = vmax.f32 %v508, 0.0
    %v689 = vmax.f32 %v513, 0.0
    %v690 = vmax.f32 %v516, 0.0
    %v691 = vmax.f32 %v521, 0.0
    %v692 = vmax.f32 %v524, 0.0
    %v693 = vmax.f32 %v529, 0.0
    %v694 = vmax.f32 %v532, 0.0
    %v695 = vmax.f32 %v537, 0.0
    %v696 = vmax.f32 %v540, 0.0
    %v697 = vmax.f32 %v545, 0.0
    %v698 = vmax.f32 %v548, 0.0
    %v699 = vmax.f32 %v553, 0.0
    %v700 = vmax.f32 %v556, 0.0
    %v701 = vmax.f32 %v561, 0.0
    %v702 = vmax.f32 %v564, 0.0
    %v703 = vmax.f32 %v569, 0.0
    %v704 = vmax.f32 %v572, 0.0
    %v705 = vmax.f32 %v577, 0.0
    %v706 = vmax.f32 %v580, 0.0
    %v707 = vmax.f32 %v585, 0.0
    %v708 = vmax.f32 %v588, 0.0
    %v709 = vmax.f32 %v593, 0.0
    %v710 = vmax.f32 %v596, 0.0
    %v711 = vmax.f32 %v601, 0.0
    %v712 = vmax.f32 %v604, 0.0
    %v713 = vmax.f32 %v609, 0.0
    %v714 = vmax.f32 %v612, 0.0
    %v715 = vmax.f32 %v617, 0.0
    %v716 = vmax.f32 %v620, 0.0
    %v717 = vmax.f32 %v625, 0.0
    %v718 = vmax.f32 %v628, 0.0
    %v719 = vmax.f32 %v633, 0.0
    %v720 = vmax.f32 %v636, 0.0
    %v721 = vmax.f32 %v641, 0.0
    %v722 = vmax.f32 %v644, 0.0
    %v723 = vmax.f32 %v649, 0.0
    %v724 = vmax.f32 %v652, 0.0
    %v725 = vmax.f32 %v657, 0.0
    %v726 = vmax.f32 %v660, 0.0
    %v727 = vadd.f32 %v663, %v664
    %v728 = vadd.f32 %v727, %v665
    %v729 = vadd.f32 %v728, %v666
    %v730 = vadd.f32 %v729, %v667
    %v731 = vadd.f32 %v730, %v668
    %v732 = vadd.f32 %v731, %v669
    %v733 = vadd.f32 %v732, %v670
    %v734 = vadd.f32 %v733, %v671
    %v735 = vadd.f32 %v734, %v672
    %v736 = vadd.f32 %v735, %v673
    %v737 = vadd.f32 %v736, %v674
    %v738 = vadd.f32 %v737, %v675
    %v739 = vadd.f32 %v738, %v676
    %v740 = vadd.f32 %v739, %v677
    %v741 = vadd.f32 %v740, %v678
    %v742 = vadd.f32 %v741, %v679
    %v743 = vadd.f32 %v742, %v680
    %v744 = vadd.f32 %v743, %v681
    %v745 = vadd.f32 %v744, %v682
    %v746 = vadd.f32 %v745, %v683
    %v747 = vadd.f32 %v746, %v684
    %v748 = vadd.f32 %v747, %v685
    %v749 = vadd.f32 %v748, %v686
    %v750 = vadd.f32 %v749, %v687
    %v751 = vadd.f32 %v750, %v688
    %v752 = vadd.f32 %v751, %v689
    %v753 = vadd.f32 %v752, %v690
    %v754 = vadd.f32 %v753, %v691
    %v755 = vadd.f32 %v754, %v692
    %v756 = vadd.f32 %v755, %v693
    %v757 = vadd.f32 %v756, %v694
    %v758 = vrot.slane %v757, 4
    %v759 = vadd.f32 %v757, %v758
    %v760 = vrot.slane %v759, 2
    %v761 = vadd.f32 %v759, %v760
    %v762 = vrot.slane %v761, 1
    %v763 = vadd.f32 %v761, %v762
    %v764 = vadd.f32 %v695, %v696
    %v765 = vadd.f32 %v764, %v697
    %v766 = vadd.f32 %v765, %v698
    %v767 = vadd.f32 %v766, %v699
    %v768 = vadd.f32 %v767, %v700
    %v769 = vadd.f32 %v768, %v701
    %v770 = vadd.f32 %v769, %v702
    %v771 = vadd.f32 %v770, %v703
    %v772 = vadd.f32 %v771, %v704
    %v773 = vadd.f32 %v772, %v705
    %v774 = vadd.f32 %v773, %v706
    %v775 = vadd.f32 %v774, %v707
    %v776 = vadd.f32 %v775, %v708
    %v777 = vadd.f32 %v776, %v709
    %v778 = vadd.f32 %v777, %v710
    %v779 = vadd.f32 %v778, %v711
    %v780 = vadd.f32 %v779, %v712
    %v781 = vadd.f32 %v780, %v713
    %v782 = vadd.f32 %v781, %v714
    %v783 = vadd.f32 %v782, %v715
    %v784 = vadd.f32 %v783, %v716
    %v785 = vadd.f32 %v784, %v717
    %v786 = vadd.f32 %v785, %v718
    %v787 = vadd.f32 %v786, %v719
    %v788 = vadd.f32 %v787, %v720
    %v789 = vadd.f32 %v788, %v721
    %v790 = vadd.f32 %v789, %v722
    %v791 = vadd.f32 %v790, %v723
    %v792 = vadd.f32 %v791, %v724
    %v793 = vadd.f32 %v792, %v725
    %v794 = vadd.f32 %v793, %v726
    %v795 = vrot.slane %v794, 4
    %v796 = vadd.f32 %v794, %v795
    %v797 = vrot.slane %v796, 2
    %v798 = vadd.f32 %v796, %v797
    %v799 = vrot.slane %v798, 1
    %v800 = vadd.f32 %v798, %v799
    %v801 = vmul.f32 %v763, 0.00390625
    %v802 = vmul.f32 %v800, 0.00390625
    %v803 = vld [vmem:[%s3] sm:$0xff]
    %v804 = vld [vmem:[%s3 + $0x8] sm:$0xff]
    %v805 = vld [vmem:[%s3 + $0x10] sm:$0xff]
    %v806 = vld [vmem:[%s3 + $0x18] sm:$0xff]
    %v807 = vld [vmem:[%s3 + $0x20] sm:$0xff]
    %v808 = vld [vmem:[%s3 + $0x28] sm:$0xff]
    %v809 = vld [vmem:[%s3 + $0x30] sm:$0xff]
    %v810 = vld [vmem:[%s3 + $0x38] sm:$0xff]
    %v811 = vld [vmem:[%s3 + $0x40] sm:$0xff]
    %v812 = vld [vmem:[%s3 + $0x48] sm:$0xff]
    %v813 = vld [vmem:[%s3 + $0x50] sm:$0xff]
    %v814 = vld [vmem:[%s3 + $0x58] sm:$0xff]
    %v815 = vld [vmem:[%s3 + $0x60] sm:$0xff]
    %v816 = vld [vmem:[%s3 + $0x68] sm:$0xff]
    %v817 = vld [vmem:[%s3 + $0x70] sm:$0xff]
    %v818 = vld [vmem:[%s3 + $0x78] sm:$0xff]
    %v819 = vld [vmem:[%s4] sm:$0x1]
    %v821 = vlaneseq
    %v822 = vshrl.u32 %v821, 7
    %v823 = vsub.s32 0, %v822
    %v824 = vrot.slane %v819, %v823
    %vm828 = vcmask 1041409
    %v829 = vsel %vm828, %v802, %v801
    %831 = vmatprep.subr.mxu0 0.0
    %832 = vmatpush1.msra.mxu0 %v818
    %833 = vmatprep.subr.mxu0 0.0
    %834 = vmatpush1.msra.mxu0 %v817
    %835 = vmatprep.subr.mxu0 0.0
    %836 = vmatpush1.msra.mxu0 %v816
    %837 = vmatprep.subr.mxu0 0.0
    %838 = vmatpush1.msra.mxu0 %v815
    %839 = vmatprep.subr.mxu0 0.0
    %840 = vmatpush1.msra.mxu0 %v814
    %841 = vmatprep.subr.mxu0 0.0
    %842 = vmatpush1.msra.mxu0 %v813
    %843 = vmatprep.subr.mxu0 0.0
    %844 = vmatpush1.msra.mxu0 %v812
    %845 = vmatprep.subr.mxu0 0.0
    %846 = vmatpush1.msra.mxu0 %v811
    %847 = vmatprep.subr.mxu0 0.0
    %848 = vmatpush1.msra.mxu0 %v810
    %849 = vmatprep.subr.mxu0 0.0
    %850 = vmatpush1.msra.mxu0 %v809
    %851 = vmatprep.subr.mxu0 0.0
    %852 = vmatpush1.msra.mxu0 %v808
    %853 = vmatprep.subr.mxu0 0.0
    %854 = vmatpush1.msra.mxu0 %v807
    %855 = vmatprep.subr.mxu0 0.0
    %856 = vmatpush1.msra.mxu0 %v806
    %857 = vmatprep.subr.mxu0 0.0
    %858 = vmatpush1.msra.mxu0 %v805
    %859 = vmatprep.subr.mxu0 0.0
    %860 = vmatpush1.msra.mxu0 %v804
    %861 = vmatprep.subr.mxu0 0.0
    %862 = vmatpush1.msra.mxu0 %v803
    %863 = vmatprep.subr.mxu0 0.0
    %864 = vmatpush2.msra.mxu0 0.0
    %865 = vmatprep.subr.mxu0 0.0
    %866 = vmatpush2.msra.mxu0 0.0
    %867 = vmatprep.subr.mxu0 0.0
    %868 = vmatpush2.msra.mxu0 0.0
    %869 = vmatprep.subr.mxu0 0.0
    %870 = vmatpush2.msra.mxu0 0.0
    %871 = vmatprep.subr.mxu0 0.0
    %872 = vmatpush2.msra.mxu0 0.0
    %873 = vmatprep.subr.mxu0 0.0
    %874 = vmatpush2.msra.mxu0 0.0
    %875 = vmatprep.subr.mxu0 0.0
    %876 = vmatpush2.msra.mxu0 0.0
    %877 = vmatprep.subr.mxu0 0.0
    %878 = vmatpush2.msra.mxu0 0.0
    %879 = vmatprep.subr.mxu0 0.0
    %880 = vmatpush2.msra.mxu0 0.0
    %881 = vmatprep.subr.mxu0 0.0
    %882 = vmatpush2.msra.mxu0 0.0
    %883 = vmatprep.subr.mxu0 0.0
    %884 = vmatpush2.msra.mxu0 0.0
    %885 = vmatprep.subr.mxu0 0.0
    %886 = vmatpush2.msra.mxu0 0.0
    %887 = vmatprep.subr.mxu0 0.0
    %888 = vmatpush2.msra.mxu0 0.0
    %889 = vmatprep.subr.mxu0 0.0
    %890 = vmatpush2.msra.mxu0 0.0
    %891 = vmatprep.subr.mxu0 0.0
    %892 = vmatpush2.msra.mxu0 0.0
    %893 = vmatprep.subr.mxu0 0.0
    %894 = vmatpush2.msra.mxu0 0.0
    %895 = vmatprep.mubr.f32.mxu0 0.0
    %896 = vmatmul.mubr.f32.gmra.mxu0 %v829
    %v897 = vpop.f32.mrf.mxu0
    %v898 = vadd.f32 %v824, %v897
    %v899 = vpop.f32.mrf.mxu0
    %900 = vdwg.mxu0
    %901 = vst [vmem:[#allocation3] sm:$0x3] %v898
    // Predicated region
    $region22: #{tpu_custom_call.1} parent=1 // pred_check
      _
    $region23: #{tpu_custom_call.1} parent=1 // pred_check_branch
      %903 = sbr.rel (0) target = $region25
    $region24: #{tpu_custom_call.1} parent=1 // pred_region
      %s905 = ssub.s32 32, 32
      %906 = vsyncadd [#allocation4], %s905
      %s908 = sshll.u32 [#allocation3], 4
      %s909 = int_to_ptr.vmem [resolvable:$true] %s908
      %911 = dma.vmem_to_hbm [thread:$0]  %s909, 32, %s5, [#allocation4]
    $region25: #{tpu_custom_call.1} parent=1 // pred_fallthru
      _
    // Predicated region
    $region26: #{tpu_custom_call.1} parent=1 // pred_check
      _
    $region27: #{tpu_custom_call.1} parent=1 // pred_check_branch
      %913 = sbr.rel (0) target = $region29
    $region28: #{tpu_custom_call.1} parent=1 // pred_region
      %914 = dma.done [#allocation4], 32
    $region29: #{tpu_custom_call.1} parent=1 // pred_fallthru
      _
    %915 = vsyncpa [#allocation4], 1

// kernel: tpu_custom_call.1
$region0: #{tpu_custom_call.1}
  #allocation0 [shape = 'u32[]', space=smem, size = 0x4, offset = 0x4, fixed_abs, tag = 'smem constant byte address 0x4 - core index']
  #allocation1 [shape = 'u32[144,128]{1,0:T(1,128)}', space=vmem, size = 0x12000, scoped, tag = 'internal scratch']
  #allocation2 [shape = 'f32[2,128]{1,0:T(2,128)}', space=vmem, size = 0x400, scoped, tag = 'scratch operand']
  %s0 = inlined_call_operand.vmem [shape: bf16[2,256,48], index: 0, kind: input, shape index: {}]
  %s1 = inlined_call_operand.vmem [shape: bf16[48,128], index: 1, kind: input, shape index: {}]
  %s2 = inlined_call_operand.vmem [shape: f32[1,128], index: 2, kind: input, shape index: {}]
  %s3 = inlined_call_operand.vmem [shape: f32[128,128], index: 3, kind: input, shape index: {}]
  %s4 = inlined_call_operand.vmem [shape: f32[1,128], index: 4, kind: input, shape index: {}]
  %s5 = inlined_call_operand.hbm [shape: f32[2,128], index: 5, kind: output, shape index: {}]
  %s6 = sld [smem:[#allocation0]]
  $region30: #{tpu_custom_call.1} parent=0
    _
  %s8 = ssub.s32 1, %s6
  %s9 = scalar_select 0, %s8, %s6
  $region1: #{tpu_custom_call.1} parent=0
    #allocation3 [shape = 'u8[1024]{0}', space=vmem, size = 0x400, scoped, tag = 'output window, operand 0, single buffered']
    #allocation4 [shape = 's32[1]{0}', space=sflag, size = 0x4, scoped, tag = 'scoped memory for tpu_custom_call.1']
    %10 = vsyncpa [#allocation4], 0
    // Predicated region
    $region2: #{tpu_custom_call.1} parent=1 // pred_check
      _
    $region3: #{tpu_custom_call.1} parent=1 // pred_check_branch
      %12 = sbr.rel (0) target = $region5
    $region4: #{tpu_custom_call.1} parent=1 // pred_region
      _
    $region5: #{tpu_custom_call.1} parent=1 // pred_fallthru
      _
    // Predicated region
    $region6: #{tpu_custom_call.1} parent=1 // pred_check
      _
    $region7: #{tpu_custom_call.1} parent=1 // pred_check_branch
      %14 = sbr.rel (0) target = $region9
    $region8: #{tpu_custom_call.1} parent=1 // pred_region
      _
    $region9: #{tpu_custom_call.1} parent=1 // pred_fallthru
      _
    // Predicated region
    $region10: #{tpu_custom_call.1} parent=1 // pred_check
      _
    $region11: #{tpu_custom_call.1} parent=1 // pred_check_branch
      %16 = sbr.rel (0) target = $region13
    $region12: #{tpu_custom_call.1} parent=1 // pred_region
      _
    $region13: #{tpu_custom_call.1} parent=1 // pred_fallthru
      _
    // Predicated region
    $region14: #{tpu_custom_call.1} parent=1 // pred_check
      _
    $region15: #{tpu_custom_call.1} parent=1 // pred_check_branch
      %18 = sbr.rel (0) target = $region17
    $region16: #{tpu_custom_call.1} parent=1 // pred_region
      _
    $region17: #{tpu_custom_call.1} parent=1 // pred_fallthru
      _
    // Predicated region
    $region18: #{tpu_custom_call.1} parent=1 // pred_check
      _
    $region19: #{tpu_custom_call.1} parent=1 // pred_check_branch
      %20 = sbr.rel (0) target = $region21
    $region20: #{tpu_custom_call.1} parent=1 // pred_region
      _
    $region21: #{tpu_custom_call.1} parent=1 // pred_fallthru
      _
    %v22 = vld [vmem:[%s0] sm:$0xf]
    %v23 = vld [vmem:[%s0 + $0x4] sm:$0xf]
    %v24 = vld [vmem:[%s0 + $0x8] sm:$0xf]
    %v25 = vld [vmem:[%s0 + $0xc] sm:$0xf]
    %v26 = vld [vmem:[%s0 + $0x10] sm:$0xf]
    %v27 = vld [vmem:[%s0 + $0x14] sm:$0xf]
    %v28 = vld [vmem:[%s0 + $0x18] sm:$0xf]
    %v29 = vld [vmem:[%s0 + $0x1c] sm:$0xf]
    %v30 = vld [vmem:[%s0 + $0x20] sm:$0xf]
    %v31 = vld [vmem:[%s0 + $0x24] sm:$0xf]
    %v32 = vld [vmem:[%s0 + $0x28] sm:$0xf]
    %v33 = vld [vmem:[%s0 + $0x2c] sm:$0xf]
    %v34 = vld [vmem:[%s0 + $0x30] sm:$0xf]
    %v35 = vld [vmem:[%s0 + $0x34] sm:$0xf]
    %v36 = vld [vmem:[%s0 + $0x38] sm:$0xf]
    %v37 = vld [vmem:[%s0 + $0x3c] sm:$0xf]
    %v38 = vld [vmem:[%s0 + $0x40] sm:$0xf]
    %v39 = vld [vmem:[%s0 + $0x44] sm:$0xf]
    %v40 = vld [vmem:[%s0 + $0x48] sm:$0xf]
    %v41 = vld [vmem:[%s0 + $0x4c] sm:$0xf]
    %v42 = vld [vmem:[%s0 + $0x50] sm:$0xf]
    %v43 = vld [vmem:[%s0 + $0x54] sm:$0xf]
    %v44 = vld [vmem:[%s0 + $0x58] sm:$0xf]
    %v45 = vld [vmem:[%s0 + $0x5c] sm:$0xf]
    %v46 = vld [vmem:[%s0 + $0x60] sm:$0xf]
    %v47 = vld [vmem:[%s0 + $0x64] sm:$0xf]
    %v48 = vld [vmem:[%s0 + $0x68] sm:$0xf]
    %v49 = vld [vmem:[%s0 + $0x6c] sm:$0xf]
    %v50 = vld [vmem:[%s0 + $0x70] sm:$0xf]
    %v51 = vld [vmem:[%s0 + $0x74] sm:$0xf]
    %v52 = vld [vmem:[%s0 + $0x78] sm:$0xf]
    %v53 = vld [vmem:[%s0 + $0x7c] sm:$0xf]
    %v54 = vld [vmem:[%s0 + $0x80] sm:$0xf]
    %v55 = vld [vmem:[%s0 + $0x84] sm:$0xf]
    %v56 = vld [vmem:[%s0 + $0x88] sm:$0xf]
    %v57 = vld [vmem:[%s0 + $0x8c] sm:$0xf]
    %v58 = vld [vmem:[%s0 + $0x90] sm:$0xf]
    %v59 = vld [vmem:[%s0 + $0x94] sm:$0xf]
    %v60 = vld [vmem:[%s0 + $0x98] sm:$0xf]
    %v61 = vld [vmem:[%s0 + $0x9c] sm:$0xf]
    %v62 = vld [vmem:[%s0 + $0xa0] sm:$0xf]
    %v63 = vld [vmem:[%s0 + $0xa4] sm:$0xf]
    %v64 = vld [vmem:[%s0 + $0xa8] sm:$0xf]
    %v65 = vld [vmem:[%s0 + $0xac] sm:$0xf]
    %v66 = vld [vmem:[%s0 + $0xb0] sm:$0xf]
    %v67 = vld [vmem:[%s0 + $0xb4] sm:$0xf]
    %v68 = vld [vmem:[%s0 + $0xb8] sm:$0xf]
    %v69 = vld [vmem:[%s0 + $0xbc] sm:$0xf]
    %v70 = vld [vmem:[%s0 + $0xc0] sm:$0xf]
    %v71 = vld [vmem:[%s0 + $0xc4] sm:$0xf]
    %v72 = vld [vmem:[%s0 + $0xc8] sm:$0xf]
    %v73 = vld [vmem:[%s0 + $0xcc] sm:$0xf]
    %v74 = vld [vmem:[%s0 + $0xd0] sm:$0xf]
    %v75 = vld [vmem:[%s0 + $0xd4] sm:$0xf]
    %v76 = vld [vmem:[%s0 + $0xd8] sm:$0xf]
    %v77 = vld [vmem:[%s0 + $0xdc] sm:$0xf]
    %v78 = vld [vmem:[%s0 + $0xe0] sm:$0xf]
    %v79 = vld [vmem:[%s0 + $0xe4] sm:$0xf]
    %v80 = vld [vmem:[%s0 + $0xe8] sm:$0xf]
    %v81 = vld [vmem:[%s0 + $0xec] sm:$0xf]
    %v82 = vld [vmem:[%s0 + $0xf0] sm:$0xf]
    %v83 = vld [vmem:[%s0 + $0xf4] sm:$0xf]
    %v84 = vld [vmem:[%s0 + $0xf8] sm:$0xf]
    %v85 = vld [vmem:[%s0 + $0xfc] sm:$0xf]
    %v86 = vld [vmem:[%s1] sm:$0xf]
    %v87 = vld [vmem:[%s1 + $0x4] sm:$0xf]
    %v88 = vld [vmem:[%s1 + $0x8] sm:$0xf]
    %v89 = vld [vmem:[%s1 + $0xc] sm:$0xf]
    %v90 = vld [vmem:[%s1 + $0x10] sm:$0xf]
    %v91 = vld [vmem:[%s1 + $0x14] sm:$0xf]
    %v92 = vld [vmem:[%s2] sm:$0x1]
    %v94 = vlaneseq
    %v95 = vshrl.u32 %v94, 7
    %v96 = vsub.s32 0, %v95
    %v97 = vrot.slane %v92, %v96
    %v163 = vunpack.c.l.b16 %v22
    %v164 = vunpack.c.l.b16 %v23
    %v165 = vunpack.c.l.b16 %v24
    %v166 = vunpack.c.l.b16 %v25
    %v167 = vunpack.c.l.b16 %v26
    %v168 = vunpack.c.l.b16 %v27
    %v169 = vunpack.c.l.b16 %v28
    %v170 = vunpack.c.l.b16 %v29
    %v171 = vunpack.c.l.b16 %v30
    %v172 = vunpack.c.l.b16 %v31
    %v173 = vunpack.c.l.b16 %v32
    %v174 = vunpack.c.l.b16 %v33
    %v175 = vunpack.c.l.b16 %v34
    %v176 = vunpack.c.l.b16 %v35
    %v177 = vunpack.c.l.b16 %v36
    %v178 = vunpack.c.l.b16 %v37
    %v179 = vunpack.c.l.b16 %v38
    %v180 = vunpack.c.l.b16 %v39
    %v181 = vunpack.c.l.b16 %v40
    %v182 = vunpack.c.l.b16 %v41
    %v183 = vunpack.c.l.b16 %v42
    %v184 = vunpack.c.l.b16 %v43
    %v185 = vunpack.c.l.b16 %v44
    %v186 = vunpack.c.l.b16 %v45
    %v187 = vunpack.c.l.b16 %v46
    %v188 = vunpack.c.l.b16 %v47
    %v189 = vunpack.c.l.b16 %v48
    %v190 = vunpack.c.l.b16 %v49
    %v191 = vunpack.c.l.b16 %v50
    %v192 = vunpack.c.l.b16 %v51
    %v193 = vunpack.c.l.b16 %v52
    %v194 = vunpack.c.l.b16 %v53
    %v195 = vunpack.c.l.b16 %v54
    %v196 = vunpack.c.l.b16 %v55
    %v197 = vunpack.c.l.b16 %v56
    %v198 = vunpack.c.l.b16 %v57
    %v199 = vunpack.c.l.b16 %v58
    %v200 = vunpack.c.l.b16 %v59
    %v201 = vunpack.c.l.b16 %v60
    %v202 = vunpack.c.l.b16 %v61
    %v203 = vunpack.c.l.b16 %v62
    %v204 = vunpack.c.l.b16 %v63
    %v205 = vunpack.c.l.b16 %v64
    %v206 = vunpack.c.l.b16 %v65
    %v207 = vunpack.c.l.b16 %v66
    %v208 = vunpack.c.l.b16 %v67
    %v209 = vunpack.c.l.b16 %v68
    %v210 = vunpack.c.l.b16 %v69
    %v211 = vunpack.c.l.b16 %v70
    %v212 = vunpack.c.l.b16 %v71
    %v213 = vunpack.c.l.b16 %v72
    %v214 = vunpack.c.l.b16 %v73
    %v215 = vunpack.c.l.b16 %v74
    %v216 = vunpack.c.l.b16 %v75
    %v217 = vunpack.c.l.b16 %v76
    %v218 = vunpack.c.l.b16 %v77
    %v219 = vunpack.c.l.b16 %v78
    %v220 = vunpack.c.l.b16 %v79
    %v221 = vunpack.c.l.b16 %v80
    %v222 = vunpack.c.l.b16 %v81
    %v223 = vunpack.c.l.b16 %v82
    %v224 = vunpack.c.l.b16 %v83
    %v225 = vunpack.c.l.b16 %v84
    %v226 = vunpack.c.l.b16 %v85
    %v227 = vpack.c.b16 %v164, %v163
    %v228 = vpack.c.b16 %v166, %v165
    %v229 = vpack.c.b16 %v168, %v167
    %v230 = vpack.c.b16 %v170, %v169
    %v231 = vpack.c.b16 %v172, %v171
    %v232 = vpack.c.b16 %v174, %v173
    %v233 = vpack.c.b16 %v176, %v175
    %v234 = vpack.c.b16 %v178, %v177
    %v235 = vpack.c.b16 %v180, %v179
    %v236 = vpack.c.b16 %v182, %v181
    %v237 = vpack.c.b16 %v184, %v183
    %v238 = vpack.c.b16 %v186, %v185
    %v239 = vpack.c.b16 %v188, %v187
    %v240 = vpack.c.b16 %v190, %v189
    %v241 = vpack.c.b16 %v192, %v191
    %v242 = vpack.c.b16 %v194, %v193
    %v243 = vpack.c.b16 %v196, %v195
    %v244 = vpack.c.b16 %v198, %v197
    %v245 = vpack.c.b16 %v200, %v199
    %v246 = vpack.c.b16 %v202, %v201
    %v247 = vpack.c.b16 %v204, %v203
    %v248 = vpack.c.b16 %v206, %v205
    %v249 = vpack.c.b16 %v208, %v207
    %v250 = vpack.c.b16 %v210, %v209
    %v251 = vpack.c.b16 %v212, %v211
    %v252 = vpack.c.b16 %v214, %v213
    %v253 = vpack.c.b16 %v216, %v215
    %v254 = vpack.c.b16 %v218, %v217
    %v255 = vpack.c.b16 %v220, %v219
    %v256 = vpack.c.b16 %v222, %v221
    %v257 = vpack.c.b16 %v224, %v223
    %v258 = vpack.c.b16 %v226, %v225
    %v265 = vunpack.c.l.b16 %v86
    %v266 = vunpack.c.l.b16 %v87
    %v267 = vunpack.c.l.b16 %v88
    %v268 = vunpack.c.l.b16 %v89
    %v269 = vunpack.c.l.b16 %v90
    %v270 = vunpack.c.l.b16 %v91
    %v271 = vpack.c.b16 %v266, %v265
    %v272 = vpack.c.b16 %v268, %v267
    %v273 = vpack.c.b16 %v270, %v269
    %vm277 = vcmask 392192
    %v279 = vsel %vm277, %v227, 0
    %v282 = vsel %vm277, %v228, 0
    %v285 = vsel %vm277, %v229, 0
    %v288 = vsel %vm277, %v230, 0
    %v291 = vsel %vm277, %v231, 0
    %v294 = vsel %vm277, %v232, 0
    %v297 = vsel %vm277, %v233, 0
    %v300 = vsel %vm277, %v234, 0
    %v303 = vsel %vm277, %v235, 0
    %v306 = vsel %vm277, %v236, 0
    %v309 = vsel %vm277, %v237, 0
    %v312 = vsel %vm277, %v238, 0
    %v315 = vsel %vm277, %v239, 0
    %v318 = vsel %vm277, %v240, 0
    %v321 = vsel %vm277, %v241, 0
    %v324 = vsel %vm277, %v242, 0
    %v327 = vsel %vm277, %v243, 0
    %v330 = vsel %vm277, %v244, 0
    %v333 = vsel %vm277, %v245, 0
    %v336 = vsel %vm277, %v246, 0
    %v339 = vsel %vm277, %v247, 0
    %v342 = vsel %vm277, %v248, 0
    %v345 = vsel %vm277, %v249, 0
    %v348 = vsel %vm277, %v250, 0
    %v351 = vsel %vm277, %v251, 0
    %v354 = vsel %vm277, %v252, 0
    %v357 = vsel %vm277, %v253, 0
    %v360 = vsel %vm277, %v254, 0
    %v363 = vsel %vm277, %v255, 0
    %v366 = vsel %vm277, %v256, 0
    %v369 = vsel %vm277, %v257, 0
    %v372 = vsel %vm277, %v258, 0
    %374 = vmatprep.subr.bf16.mxu0 0
    %375 = vmatpush1.bf16.msra.mxu0 0
    %376 = vmatprep.subr.bf16.mxu0 0
    %377 = vmatpush1.bf16.msra.mxu0 0
    %378 = vmatprep.subr.bf16.mxu0 0
    %379 = vmatpush1.bf16.msra.mxu0 0
    %380 = vmatprep.subr.bf16.mxu0 0
    %381 = vmatpush1.bf16.msra.mxu0 0
    %382 = vmatprep.subr.bf16.mxu0 0
    %383 = vmatpush1.bf16.msra.mxu0 0
    %384 = vmatprep.subr.bf16.mxu0 0
    %385 = vmatpush1.bf16.msra.mxu0 %v273
    %386 = vmatprep.subr.bf16.mxu0 0
    %387 = vmatpush1.bf16.msra.mxu0 %v272
    %388 = vmatprep.subr.bf16.mxu0 0
    %389 = vmatpush1.bf16.msra.mxu0 %v271
    %390 = vmatprep.subr.bf16.mxu0 0
    %391 = vmatpush2.bf16.msra.mxu0 0
    %392 = vmatprep.subr.bf16.mxu0 0
    %393 = vmatpush2.bf16.msra.mxu0 0
    %394 = vmatprep.subr.bf16.mxu0 0
    %395 = vmatpush2.bf16.msra.mxu0 0
    %396 = vmatprep.subr.bf16.mxu0 0
    %397 = vmatpush2.bf16.msra.mxu0 0
    %398 = vmatprep.subr.bf16.mxu0 0
    %399 = vmatpush2.bf16.msra.mxu0 0
    %400 = vmatprep.subr.bf16.mxu0 0
    %401 = vmatpush2.bf16.msra.mxu0 0
    %402 = vmatprep.subr.bf16.mxu0 0
    %403 = vmatpush2.bf16.msra.mxu0 0
    %404 = vmatprep.subr.bf16.mxu0 0
    %405 = vmatpush2.bf16.msra.mxu0 0
    %406 = vmatprep.mubr.bf16.mxu0 0
    %407 = vmatmul.mubr.bf16.gmra.mxu0 %v279
    %v408 = vpop.f32.mrf.mxu0
    %v409 = vadd.f32 %v97, %v408
    %v410 = vpop.f32.mrf.mxu0
    %v411 = vpop.f32.mrf.mxu0
    %v412 = vadd.f32 %v97, %v411
    %v413 = vpop.f32.mrf.mxu0
    %414 = vmatprep.mubr.bf16.mxu0 0
    %415 = vmatmul.mubr.bf16.gmra.mxu0 %v282
    %v416 = vpop.f32.mrf.mxu0
    %v417 = vadd.f32 %v97, %v416
    %v418 = vpop.f32.mrf.mxu0
    %v419 = vpop.f32.mrf.mxu0
    %v420 = vadd.f32 %v97, %v419
    %v421 = vpop.f32.mrf.mxu0
    %422 = vmatprep.mubr.bf16.mxu0 0
    %423 = vmatmul.mubr.bf16.gmra.mxu0 %v285
    %v424 = vpop.f32.mrf.mxu0
    %v425 = vadd.f32 %v97, %v424
    %v426 = vpop.f32.mrf.mxu0
    %v427 = vpop.f32.mrf.mxu0
    %v428 = vadd.f32 %v97, %v427
    %v429 = vpop.f32.mrf.mxu0
    %430 = vmatprep.mubr.bf16.mxu0 0
    %431 = vmatmul.mubr.bf16.gmra.mxu0 %v288
    %v432 = vpop.f32.mrf.mxu0
    %v433 = vadd.f32 %v97, %v432
    %v434 = vpop.f32.mrf.mxu0
    %v435 = vpop.f32.mrf.mxu0
    %v436 = vadd.f32 %v97, %v435
    %v437 = vpop.f32.mrf.mxu0
    %438 = vmatprep.mubr.bf16.mxu0 0
    %439 = vmatmul.mubr.bf16.gmra.mxu0 %v291
    %v440 = vpop.f32.mrf.mxu0
    %v441 = vadd.f32 %v97, %v440
    %v442 = vpop.f32.mrf.mxu0
    %v443 = vpop.f32.mrf.mxu0
    %v444 = vadd.f32 %v97, %v443
    %v445 = vpop.f32.mrf.mxu0
    %446 = vmatprep.mubr.bf16.mxu0 0
    %447 = vmatmul.mubr.bf16.gmra.mxu0 %v294
    %v448 = vpop.f32.mrf.mxu0
    %v449 = vadd.f32 %v97, %v448
    %v450 = vpop.f32.mrf.mxu0
    %v451 = vpop.f32.mrf.mxu0
    %v452 = vadd.f32 %v97, %v451
    %v453 = vpop.f32.mrf.mxu0
    %454 = vmatprep.mubr.bf16.mxu0 0
    %455 = vmatmul.mubr.bf16.gmra.mxu0 %v297
    %v456 = vpop.f32.mrf.mxu0
    %v457 = vadd.f32 %v97, %v456
    %v458 = vpop.f32.mrf.mxu0
    %v459 = vpop.f32.mrf.mxu0
    %v460 = vadd.f32 %v97, %v459
    %v461 = vpop.f32.mrf.mxu0
    %462 = vmatprep.mubr.bf16.mxu0 0
    %463 = vmatmul.mubr.bf16.gmra.mxu0 %v300
    %v464 = vpop.f32.mrf.mxu0
    %v465 = vadd.f32 %v97, %v464
    %v466 = vpop.f32.mrf.mxu0
    %v467 = vpop.f32.mrf.mxu0
    %v468 = vadd.f32 %v97, %v467
    %v469 = vpop.f32.mrf.mxu0
    %470 = vmatprep.mubr.bf16.mxu0 0
    %471 = vmatmul.mubr.bf16.gmra.mxu0 %v303
    %v472 = vpop.f32.mrf.mxu0
    %v473 = vadd.f32 %v97, %v472
    %v474 = vpop.f32.mrf.mxu0
    %v475 = vpop.f32.mrf.mxu0
    %v476 = vadd.f32 %v97, %v475
    %v477 = vpop.f32.mrf.mxu0
    %478 = vmatprep.mubr.bf16.mxu0 0
    %479 = vmatmul.mubr.bf16.gmra.mxu0 %v306
    %v480 = vpop.f32.mrf.mxu0
    %v481 = vadd.f32 %v97, %v480
    %v482 = vpop.f32.mrf.mxu0
    %v483 = vpop.f32.mrf.mxu0
    %v484 = vadd.f32 %v97, %v483
    %v485 = vpop.f32.mrf.mxu0
    %486 = vmatprep.mubr.bf16.mxu0 0
    %487 = vmatmul.mubr.bf16.gmra.mxu0 %v309
    %v488 = vpop.f32.mrf.mxu0
    %v489 = vadd.f32 %v97, %v488
    %v490 = vpop.f32.mrf.mxu0
    %v491 = vpop.f32.mrf.mxu0
    %v492 = vadd.f32 %v97, %v491
    %v493 = vpop.f32.mrf.mxu0
    %494 = vmatprep.mubr.bf16.mxu0 0
    %495 = vmatmul.mubr.bf16.gmra.mxu0 %v312
    %v496 = vpop.f32.mrf.mxu0
    %v497 = vadd.f32 %v97, %v496
    %v498 = vpop.f32.mrf.mxu0
    %v499 = vpop.f32.mrf.mxu0
    %v500 = vadd.f32 %v97, %v499
    %v501 = vpop.f32.mrf.mxu0
    %502 = vmatprep.mubr.bf16.mxu0 0
    %503 = vmatmul.mubr.bf16.gmra.mxu0 %v315
    %v504 = vpop.f32.mrf.mxu0
    %v505 = vadd.f32 %v97, %v504
    %v506 = vpop.f32.mrf.mxu0
    %v507 = vpop.f32.mrf.mxu0
    %v508 = vadd.f32 %v97, %v507
    %v509 = vpop.f32.mrf.mxu0
    %510 = vmatprep.mubr.bf16.mxu0 0
    %511 = vmatmul.mubr.bf16.gmra.mxu0 %v318
    %v512 = vpop.f32.mrf.mxu0
    %v513 = vadd.f32 %v97, %v512
    %v514 = vpop.f32.mrf.mxu0
    %v515 = vpop.f32.mrf.mxu0
    %v516 = vadd.f32 %v97, %v515
    %v517 = vpop.f32.mrf.mxu0
    %518 = vmatprep.mubr.bf16.mxu0 0
    %519 = vmatmul.mubr.bf16.gmra.mxu0 %v321
    %v520 = vpop.f32.mrf.mxu0
    %v521 = vadd.f32 %v97, %v520
    %v522 = vpop.f32.mrf.mxu0
    %v523 = vpop.f32.mrf.mxu0
    %v524 = vadd.f32 %v97, %v523
    %v525 = vpop.f32.mrf.mxu0
    %526 = vmatprep.mubr.bf16.mxu0 0
    %527 = vmatmul.mubr.bf16.gmra.mxu0 %v324
    %v528 = vpop.f32.mrf.mxu0
    %v529 = vadd.f32 %v97, %v528
    %v530 = vpop.f32.mrf.mxu0
    %v531 = vpop.f32.mrf.mxu0
    %v532 = vadd.f32 %v97, %v531
    %v533 = vpop.f32.mrf.mxu0
    %534 = vmatprep.mubr.bf16.mxu0 0
    %535 = vmatmul.mubr.bf16.gmra.mxu0 %v327
    %v536 = vpop.f32.mrf.mxu0
    %v537 = vadd.f32 %v97, %v536
    %v538 = vpop.f32.mrf.mxu0
    %v539 = vpop.f32.mrf.mxu0
    %v540 = vadd.f32 %v97, %v539
    %v541 = vpop.f32.mrf.mxu0
    %542 = vmatprep.mubr.bf16.mxu0 0
    %543 = vmatmul.mubr.bf16.gmra.mxu0 %v330
    %v544 = vpop.f32.mrf.mxu0
    %v545 = vadd.f32 %v97, %v544
    %v546 = vpop.f32.mrf.mxu0
    %v547 = vpop.f32.mrf.mxu0
    %v548 = vadd.f32 %v97, %v547
    %v549 = vpop.f32.mrf.mxu0
    %550 = vmatprep.mubr.bf16.mxu0 0
    %551 = vmatmul.mubr.bf16.gmra.mxu0 %v333
    %v552 = vpop.f32.mrf.mxu0
    %v553 = vadd.f32 %v97, %v552
    %v554 = vpop.f32.mrf.mxu0
    %v555 = vpop.f32.mrf.mxu0
    %v556 = vadd.f32 %v97, %v555
    %v557 = vpop.f32.mrf.mxu0
    %558 = vmatprep.mubr.bf16.mxu0 0
    %559 = vmatmul.mubr.bf16.gmra.mxu0 %v336
    %v560 = vpop.f32.mrf.mxu0
    %v561 = vadd.f32 %v97, %v560
    %v562 = vpop.f32.mrf.mxu0
    %v563 = vpop.f32.mrf.mxu0
    %v564 = vadd.f32 %v97, %v563
    %v565 = vpop.f32.mrf.mxu0
    %566 = vmatprep.mubr.bf16.mxu0 0
    %567 = vmatmul.mubr.bf16.gmra.mxu0 %v339
    %v568 = vpop.f32.mrf.mxu0
    %v569 = vadd.f32 %v97, %v568
    %v570 = vpop.f32.mrf.mxu0
    %v571 = vpop.f32.mrf.mxu0
    %v572 = vadd.f32 %v97, %v571
    %v573 = vpop.f32.mrf.mxu0
    %574 = vmatprep.mubr.bf16.mxu0 0
    %575 = vmatmul.mubr.bf16.gmra.mxu0 %v342
    %v576 = vpop.f32.mrf.mxu0
    %v577 = vadd.f32 %v97, %v576
    %v578 = vpop.f32.mrf.mxu0
    %v579 = vpop.f32.mrf.mxu0
    %v580 = vadd.f32 %v97, %v579
    %v581 = vpop.f32.mrf.mxu0
    %582 = vmatprep.mubr.bf16.mxu0 0
    %583 = vmatmul.mubr.bf16.gmra.mxu0 %v345
    %v584 = vpop.f32.mrf.mxu0
    %v585 = vadd.f32 %v97, %v584
    %v586 = vpop.f32.mrf.mxu0
    %v587 = vpop.f32.mrf.mxu0
    %v588 = vadd.f32 %v97, %v587
    %v589 = vpop.f32.mrf.mxu0
    %590 = vmatprep.mubr.bf16.mxu0 0
    %591 = vmatmul.mubr.bf16.gmra.mxu0 %v348
    %v592 = vpop.f32.mrf.mxu0
    %v593 = vadd.f32 %v97, %v592
    %v594 = vpop.f32.mrf.mxu0
    %v595 = vpop.f32.mrf.mxu0
    %v596 = vadd.f32 %v97, %v595
    %v597 = vpop.f32.mrf.mxu0
    %598 = vmatprep.mubr.bf16.mxu0 0
    %599 = vmatmul.mubr.bf16.gmra.mxu0 %v351
    %v600 = vpop.f32.mrf.mxu0
    %v601 = vadd.f32 %v97, %v600
    %v602 = vpop.f32.mrf.mxu0
    %v603 = vpop.f32.mrf.mxu0
    %v604 = vadd.f32 %v97, %v603
    %v605 = vpop.f32.mrf.mxu0
    %606 = vmatprep.mubr.bf16.mxu0 0
    %607 = vmatmul.mubr.bf16.gmra.mxu0 %v354
    %v608 = vpop.f32.mrf.mxu0
    %v609 = vadd.f32 %v97, %v608
    %v610 = vpop.f32.mrf.mxu0
    %v611 = vpop.f32.mrf.mxu0
    %v612 = vadd.f32 %v97, %v611
    %v613 = vpop.f32.mrf.mxu0
    %614 = vmatprep.mubr.bf16.mxu0 0
    %615 = vmatmul.mubr.bf16.gmra.mxu0 %v357
    %v616 = vpop.f32.mrf.mxu0
    %v617 = vadd.f32 %v97, %v616
    %v618 = vpop.f32.mrf.mxu0
    %v619 = vpop.f32.mrf.mxu0
    %v620 = vadd.f32 %v97, %v619
    %v621 = vpop.f32.mrf.mxu0
    %622 = vmatprep.mubr.bf16.mxu0 0
    %623 = vmatmul.mubr.bf16.gmra.mxu0 %v360
    %v624 = vpop.f32.mrf.mxu0
    %v625 = vadd.f32 %v97, %v624
    %v626 = vpop.f32.mrf.mxu0
    %v627 = vpop.f32.mrf.mxu0
    %v628 = vadd.f32 %v97, %v627
    %v629 = vpop.f32.mrf.mxu0
    %630 = vmatprep.mubr.bf16.mxu0 0
    %631 = vmatmul.mubr.bf16.gmra.mxu0 %v363
    %v632 = vpop.f32.mrf.mxu0
    %v633 = vadd.f32 %v97, %v632
    %v634 = vpop.f32.mrf.mxu0
    %v635 = vpop.f32.mrf.mxu0
    %v636 = vadd.f32 %v97, %v635
    %v637 = vpop.f32.mrf.mxu0
    %638 = vmatprep.mubr.bf16.mxu0 0
    %639 = vmatmul.mubr.bf16.gmra.mxu0 %v366
    %v640 = vpop.f32.mrf.mxu0
    %v641 = vadd.f32 %v97, %v640
    %v642 = vpop.f32.mrf.mxu0
    %v643 = vpop.f32.mrf.mxu0
    %v644 = vadd.f32 %v97, %v643
    %v645 = vpop.f32.mrf.mxu0
    %646 = vmatprep.mubr.bf16.mxu0 0
    %647 = vmatmul.mubr.bf16.gmra.mxu0 %v369
    %v648 = vpop.f32.mrf.mxu0
    %v649 = vadd.f32 %v97, %v648
    %v650 = vpop.f32.mrf.mxu0
    %v651 = vpop.f32.mrf.mxu0
    %v652 = vadd.f32 %v97, %v651
    %v653 = vpop.f32.mrf.mxu0
    %654 = vmatprep.mubr.bf16.mxu0 0
    %655 = vmatmul.mubr.bf16.gmra.mxu0 %v372
    %v656 = vpop.f32.mrf.mxu0
    %v657 = vadd.f32 %v97, %v656
    %v658 = vpop.f32.mrf.mxu0
    %v659 = vpop.f32.mrf.mxu0
    %v660 = vadd.f32 %v97, %v659
    %v661 = vpop.f32.mrf.mxu0
    %662 = vdwg.mxu0
    %v663 = vmax.f32 %v409, 0.0
    %v664 = vmax.f32 %v412, 0.0
    %v665 = vmax.f32 %v417, 0.0
    %v666 = vmax.f32 %v420, 0.0
    %v667 = vmax.f32 %v425, 0.0
    %v668 = vmax.f32 %v428, 0.0
    %v669 = vmax.f32 %v433, 0.0
    %v670 = vmax.f32 %v436, 0.0
    %v671 = vmax.f32 %v441, 0.0
    %v672 = vmax.f32 %v444, 0.0
    %v673 = vmax.f32 %v449, 0.0
    %v674 = vmax.f32 %v452, 0.0
    %v675 = vmax.f32 %v457, 0.0
    %v676 = vmax.f32 %v460, 0.0
    %v677 = vmax.f32 %v465, 0.0
    %v678 = vmax.f32 %v468, 0.0
    %v679 = vmax.f32 %v473, 0.0
    %v680 = vmax.f32 %v476, 0.0
    %v681 = vmax.f32 %v481, 0.0
    %v682 = vmax.f32 %v484, 0.0
    %v683 = vmax.f32 %v489, 0.0
    %v684 = vmax.f32 %v492, 0.0
    %v685 = vmax.f32 %v497, 0.0
    %v686 = vmax.f32 %v500, 0.0
    %v687 = vmax.f32 %v505, 0.0
    %v688 = vmax.f32 %v508, 0.0
    %v689 = vmax.f32 %v513, 0.0
    %v690 = vmax.f32 %v516, 0.0
    %v691 = vmax.f32 %v521, 0.0
    %v692 = vmax.f32 %v524, 0.0
    %v693 = vmax.f32 %v529, 0.0
    %v694 = vmax.f32 %v532, 0.0
    %v695 = vmax.f32 %v537, 0.0
    %v696 = vmax.f32 %v540, 0.0
    %v697 = vmax.f32 %v545, 0.0
    %v698 = vmax.f32 %v548, 0.0
    %v699 = vmax.f32 %v553, 0.0
    %v700 = vmax.f32 %v556, 0.0
    %v701 = vmax.f32 %v561, 0.0
    %v702 = vmax.f32 %v564, 0.0
    %v703 = vmax.f32 %v569, 0.0
    %v704 = vmax.f32 %v572, 0.0
    %v705 = vmax.f32 %v577, 0.0
    %v706 = vmax.f32 %v580, 0.0
    %v707 = vmax.f32 %v585, 0.0
    %v708 = vmax.f32 %v588, 0.0
    %v709 = vmax.f32 %v593, 0.0
    %v710 = vmax.f32 %v596, 0.0
    %v711 = vmax.f32 %v601, 0.0
    %v712 = vmax.f32 %v604, 0.0
    %v713 = vmax.f32 %v609, 0.0
    %v714 = vmax.f32 %v612, 0.0
    %v715 = vmax.f32 %v617, 0.0
    %v716 = vmax.f32 %v620, 0.0
    %v717 = vmax.f32 %v625, 0.0
    %v718 = vmax.f32 %v628, 0.0
    %v719 = vmax.f32 %v633, 0.0
    %v720 = vmax.f32 %v636, 0.0
    %v721 = vmax.f32 %v641, 0.0
    %v722 = vmax.f32 %v644, 0.0
    %v723 = vmax.f32 %v649, 0.0
    %v724 = vmax.f32 %v652, 0.0
    %v725 = vmax.f32 %v657, 0.0
    %v726 = vmax.f32 %v660, 0.0
    %v727 = vadd.f32 %v663, %v664
    %v728 = vadd.f32 %v727, %v665
    %v729 = vadd.f32 %v728, %v666
    %v730 = vadd.f32 %v729, %v667
    %v731 = vadd.f32 %v730, %v668
    %v732 = vadd.f32 %v731, %v669
    %v733 = vadd.f32 %v732, %v670
    %v734 = vadd.f32 %v733, %v671
    %v735 = vadd.f32 %v734, %v672
    %v736 = vadd.f32 %v735, %v673
    %v737 = vadd.f32 %v736, %v674
    %v738 = vadd.f32 %v737, %v675
    %v739 = vadd.f32 %v738, %v676
    %v740 = vadd.f32 %v739, %v677
    %v741 = vadd.f32 %v740, %v678
    %v742 = vadd.f32 %v741, %v679
    %v743 = vadd.f32 %v742, %v680
    %v744 = vadd.f32 %v743, %v681
    %v745 = vadd.f32 %v744, %v682
    %v746 = vadd.f32 %v745, %v683
    %v747 = vadd.f32 %v746, %v684
    %v748 = vadd.f32 %v747, %v685
    %v749 = vadd.f32 %v748, %v686
    %v750 = vadd.f32 %v749, %v687
    %v751 = vadd.f32 %v750, %v688
    %v752 = vadd.f32 %v751, %v689
    %v753 = vadd.f32 %v752, %v690
    %v754 = vadd.f32 %v753, %v691
    %v755 = vadd.f32 %v754, %v692
    %v756 = vadd.f32 %v755, %v693
    %v757 = vadd.f32 %v756, %v694
    %v758 = vrot.slane %v757, 4
    %v759 = vadd.f32 %v757, %v758
    %v760 = vrot.slane %v759, 2
    %v761 = vadd.f32 %v759, %v760
    %v762 = vrot.slane %v761, 1
    %v763 = vadd.f32 %v761, %v762
    %v764 = vadd.f32 %v695, %v696
    %v765 = vadd.f32 %v764, %v697
    %v766 = vadd.f32 %v765, %v698
    %v767 = vadd.f32 %v766, %v699
    %v768 = vadd.f32 %v767, %v700
    %v769 = vadd.f32 %v768, %v701
    %v770 = vadd.f32 %v769, %v702
    %v771 = vadd.f32 %v770, %v703
    %v772 = vadd.f32 %v771, %v704
    %v773 = vadd.f32 %v772, %v705
    %v774 = vadd.f32 %v773, %v706
    %v775 = vadd.f32 %v774, %v707
    %v776 = vadd.f32 %v775, %v708
    %v777 = vadd.f32 %v776, %v709
    %v778 = vadd.f32 %v777, %v710
    %v779 = vadd.f32 %v778, %v711
    %v780 = vadd.f32 %v779, %v712
    %v781 = vadd.f32 %v780, %v713
    %v782 = vadd.f32 %v781, %v714
    %v783 = vadd.f32 %v782, %v715
    %v784 = vadd.f32 %v783, %v716
    %v785 = vadd.f32 %v784, %v717
    %v786 = vadd.f32 %v785, %v718
    %v787 = vadd.f32 %v786, %v719
    %v788 = vadd.f32 %v787, %v720
    %v789 = vadd.f32 %v788, %v721
    %v790 = vadd.f32 %v789, %v722
    %v791 = vadd.f32 %v790, %v723
    %v792 = vadd.f32 %v791, %v724
    %v793 = vadd.f32 %v792, %v725
    %v794 = vadd.f32 %v793, %v726
    %v795 = vrot.slane %v794, 4
    %v796 = vadd.f32 %v794, %v795
    %v797 = vrot.slane %v796, 2
    %v798 = vadd.f32 %v796, %v797
    %v799 = vrot.slane %v798, 1
    %v800 = vadd.f32 %v798, %v799
    %v801 = vmul.f32 %v763, 0.00390625
    %v802 = vmul.f32 %v800, 0.00390625
    %v803 = vld [vmem:[%s3] sm:$0xff]
    %v804 = vld [vmem:[%s3 + $0x8] sm:$0xff]
    %v805 = vld [vmem:[%s3 + $0x10] sm:$0xff]
    %v806 = vld [vmem:[%s3 + $0x18] sm:$0xff]
    %v807 = vld [vmem:[%s3 + $0x20] sm:$0xff]
    %v808 = vld [vmem:[%s3 + $0x28] sm:$0xff]
    %v809 = vld [vmem:[%s3 + $0x30] sm:$0xff]
    %v810 = vld [vmem:[%s3 + $0x38] sm:$0xff]
    %v811 = vld [vmem:[%s3 + $0x40] sm:$0xff]
    %v812 = vld [vmem:[%s3 + $0x48] sm:$0xff]
    %v813 = vld [vmem:[%s3 + $0x50] sm:$0xff]
    %v814 = vld [vmem:[%s3 + $0x58] sm:$0xff]
    %v815 = vld [vmem:[%s3 + $0x60] sm:$0xff]
    %v816 = vld [vmem:[%s3 + $0x68] sm:$0xff]
    %v817 = vld [vmem:[%s3 + $0x70] sm:$0xff]
    %v818 = vld [vmem:[%s3 + $0x78] sm:$0xff]
    %v819 = vld [vmem:[%s4] sm:$0x1]
    %v821 = vlaneseq
    %v822 = vshrl.u32 %v821, 7
    %v823 = vsub.s32 0, %v822
    %v824 = vrot.slane %v819, %v823
    %vm828 = vcmask 1041409
    %v829 = vsel %vm828, %v802, %v801
    %831 = vmatprep.subr.mxu0 0.0
    %832 = vmatpush1.msra.mxu0 %v818
    %833 = vmatprep.subr.mxu0 0.0
    %834 = vmatpush1.msra.mxu0 %v817
    %835 = vmatprep.subr.mxu0 0.0
    %836 = vmatpush1.msra.mxu0 %v816
    %837 = vmatprep.subr.mxu0 0.0
    %838 = vmatpush1.msra.mxu0 %v815
    %839 = vmatprep.subr.mxu0 0.0
    %840 = vmatpush1.msra.mxu0 %v814
    %841 = vmatprep.subr.mxu0 0.0
    %842 = vmatpush1.msra.mxu0 %v813
    %843 = vmatprep.subr.mxu0 0.0
    %844 = vmatpush1.msra.mxu0 %v812
    %845 = vmatprep.subr.mxu0 0.0
    %846 = vmatpush1.msra.mxu0 %v811
    %847 = vmatprep.subr.mxu0 0.0
    %848 = vmatpush1.msra.mxu0 %v810
    %849 = vmatprep.subr.mxu0 0.0
    %850 = vmatpush1.msra.mxu0 %v809
    %851 = vmatprep.subr.mxu0 0.0
    %852 = vmatpush1.msra.mxu0 %v808
    %853 = vmatprep.subr.mxu0 0.0
    %854 = vmatpush1.msra.mxu0 %v807
    %855 = vmatprep.subr.mxu0 0.0
    %856 = vmatpush1.msra.mxu0 %v806
    %857 = vmatprep.subr.mxu0 0.0
    %858 = vmatpush1.msra.mxu0 %v805
    %859 = vmatprep.subr.mxu0 0.0
    %860 = vmatpush1.msra.mxu0 %v804
    %861 = vmatprep.subr.mxu0 0.0
    %862 = vmatpush1.msra.mxu0 %v803
    %863 = vmatprep.subr.mxu0 0.0
    %864 = vmatpush2.msra.mxu0 0.0
    %865 = vmatprep.subr.mxu0 0.0
    %866 = vmatpush2.msra.mxu0 0.0
    %867 = vmatprep.subr.mxu0 0.0
    %868 = vmatpush2.msra.mxu0 0.0
    %869 = vmatprep.subr.mxu0 0.0
    %870 = vmatpush2.msra.mxu0 0.0
    %871 = vmatprep.subr.mxu0 0.0
    %872 = vmatpush2.msra.mxu0 0.0
    %873 = vmatprep.subr.mxu0 0.0
    %874 = vmatpush2.msra.mxu0 0.0
    %875 = vmatprep.subr.mxu0 0.0
    %876 = vmatpush2.msra.mxu0 0.0
    %877 = vmatprep.subr.mxu0 0.0
    %878 = vmatpush2.msra.mxu0 0.0
    %879 = vmatprep.subr.mxu0 0.0
    %880 = vmatpush2.msra.mxu0 0.0
    %881 = vmatprep.subr.mxu0 0.0
    %882 = vmatpush2.msra.mxu0 0.0
    %883 = vmatprep.subr.mxu0 0.0
    %884 = vmatpush2.msra.mxu0 0.0
    %885 = vmatprep.subr.mxu0 0.0
    %886 = vmatpush2.msra.mxu0 0.0
    %887 = vmatprep.subr.mxu0 0.0
    %888 = vmatpush2.msra.mxu0 0.0
    %889 = vmatprep.subr.mxu0 0.0
    %890 = vmatpush2.msra.mxu0 0.0
    %891 = vmatprep.subr.mxu0 0.0
    %892 = vmatpush2.msra.mxu0 0.0
    %893 = vmatprep.subr.mxu0 0.0
    %894 = vmatpush2.msra.mxu0 0.0
    %895 = vmatprep.mubr.f32.mxu0 0.0
    %896 = vmatmul.mubr.f32.gmra.mxu0 %v829
    %v897 = vpop.f32.mrf.mxu0
    %v898 = vadd.f32 %v824, %v897
    %v899 = vpop.f32.mrf.mxu0
    %900 = vdwg.mxu0
    %901 = vst [vmem:[#allocation3] sm:$0x3] %v898
    // Predicated region
    $region22: #{tpu_custom_call.1} parent=1 // pred_check
      _
    $region23: #{tpu_custom_call.1} parent=1 // pred_check_branch
      %903 = sbr.rel (0) target = $region25
    $region24: #{tpu_custom_call.1} parent=1 // pred_region
      %s905 = ssub.s32 32, 32
      %906 = vsyncadd [#allocation4], %s905
      %s908 = sshll.u32 [#allocation3], 4
      %s909 = int_to_ptr.vmem [resolvable:$true] %s908
      %911 = dma.vmem_to_hbm [thread:$0]  %s909, 32, %s5, [#allocation4]
    $region25: #{tpu_custom_call.1} parent=1 // pred_fallthru
      _
    // Predicated region
    $region26: #{tpu_custom_call.1} parent=1 // pred_check
      _
    $region27: #{tpu_custom_call.1} parent=1 // pred_check_branch
      %913 = sbr.rel (0) target = $region29
    $region28: #{tpu_custom_call.1} parent=1 // pred_region
      %914 = dma.done [#allocation4], 32
    $region29: #{tpu_custom_call.1} parent=1 // pred_fallthru
      _
    %915 = vsyncpa [#allocation4], 1

</llo_original>
